<compile_context>
chip_gen: v7x
topology: tpu7x:2x2x1
jax: 0.10.0
libtpu: 0.0.40
codegen_flags: <defaults>
</compile_context>

<pallas_src>
import functools

import jax
import jax.numpy as jnp
import numpy as np
from jax import lax
from jax.experimental import pallas as pl
from jax.experimental.pallas import tpu as pltpu

EPS = 1e-5
# Scoped-VMEM budget: <= v7x physical (64 MiB/TC); could be raised on v5e/v6e.
_VMEM_LIMIT = 48 * 1024 * 1024


# ----------------------------- Pallas kernel ------------------------------- #

def _make_bottleneck_row_kernel(stride, H, W, has_downsample):
    """Fused Bottleneck kernel producing one output row per grid step.

    Inputs (refs, in order):
      x0, x1, x2 : three 1-row views of the padded, width-phase-split input,
                   block (1, s, 1, Wp, Cin) bf16, rows stride*oh + {0,1,2}.
      w1,(s1,b1), w2,(s2,b2), w3,(s3,b3) [, wd,(sd,bd)] : resident weights /
                   folded-BN scale+bias (bf16 weights, f32 scale/bias).
      out_ref    : block (1, 1, Wo, Cout) bf16.
    """
    s = stride
    Wo = W // s
    Wp = (W + 2) // s

    def kernel(*refs):
        if has_downsample:
            (x0, x1, x2, w1_ref, s1_ref, b1_ref, w2_ref, s2_ref, b2_ref,
             w3_ref, s3_ref, b3_ref, wd_ref, sd_ref, bd_ref, out_ref) = refs
        else:
            (x0, x1, x2, w1_ref, s1_ref, b1_ref, w2_ref, s2_ref, b2_ref,
             w3_ref, s3_ref, b3_ref, out_ref) = refs
        x_rows = (x0, x1, x2)
        oh = pl.program_id(1)

        w1 = w1_ref[...]                     # (Cin, P)  bf16
        scale1 = s1_ref[...]                 # (1, P)    f32
        bias1 = b1_ref[...]
        P = w1.shape[1]

        col_ids = lax.broadcasted_iota(jnp.int32, (Wp, 1), 0)

        # ---- stage 1: 1x1 conv + BN + ReLU on the three padded input rows.
        # a1[dy][cp] == conv1 activation of padded row (s*oh + dy), width
        # phase cp, with the 3x3-conv zero-padding positions forced to zero.
        a1 = []
        for dy in range(3):
            row_is_pad = jnp.logical_or(s * oh + dy == 0, s * oh + dy == H + 1)
            phases = []
            for cp in range(s):
                xv = x_rows[dy][0, cp, 0, :, :]                # (Wp, Cin) bf16
                z = jnp.dot(xv, w1, preferred_element_type=jnp.float32)
                z = jnp.maximum(z * scale1 + bias1, 0.0)
                keep = jnp.logical_not(row_is_pad)
                pad_cols = []
                if cp == 0:                                    # padded col 0
                    pad_cols.append(0)
                if cp == (W + 1) % s:                          # padded col W+1
                    pad_cols.append((W + 1) // s)
                for c in pad_cols:
                    keep = jnp.logical_and(keep, col_ids != c)
                z = jnp.where(keep, z, 0.0)
                phases.append(z.astype(jnp.bfloat16))
            a1.append(phases)

        # ---- stage 2: 3x3 conv (stride folded into the width phases) + BN + ReLU
        acc = jnp.zeros((Wo, P), jnp.float32)
        for dy in range(3):
            for dx in range(3):
                tap = a1[dy][dx % s][dx // s: dx // s + Wo, :]  # (Wo, P) bf16
                acc = acc + jnp.dot(tap, w2_ref[dy * 3 + dx],
                                    preferred_element_type=jnp.float32)
        a2 = jnp.maximum(acc * s2_ref[...] + b2_ref[...], 0.0)
        a2 = a2.astype(jnp.bfloat16)                            # (Wo, P)

        # ---- stage 3: 1x1 conv + BN + residual add + ReLU (one output row).
        z3 = jnp.dot(a2, w3_ref[...], preferred_element_type=jnp.float32)
        z3 = z3 * s3_ref[...] + b3_ref[...]                     # (Wo, Cout) f32

        # residual pixels x[s*oh, s*ow] live on the centre row view (dy == 1)
        xr = x_rows[1][0, 1 % s, 0, :, :][1 // s: 1 // s + Wo, :]   # (Wo, Cin)
        if has_downsample:
            r = jnp.dot(xr, wd_ref[...], preferred_element_type=jnp.float32)
            r = r * sd_ref[...] + bd_ref[...]
        else:
            r = xr.astype(jnp.float32)

        out_ref[0, 0] = jnp.maximum(z3 + r, 0.0).astype(out_ref.dtype)

    return kernel


# ------------------------------- glue (JAX) -------------------------------- #

def _fuse_bn(bn):
    gamma, beta, mean, var = bn
    scale = gamma / jnp.sqrt(var + EPS)
    bias = beta - mean * scale
    return scale.astype(jnp.float32), bias.astype(jnp.float32)


def prepare_bottleneck_params(params):
    """One-time conversion of PyTorch-layout weights into kernel layouts."""
    planes, cin = params["w1"].shape[:2]
    cout = params["w3"].shape[0]
    s1, b1 = _fuse_bn(params["bn1"])
    s2, b2 = _fuse_bn(params["bn2"])
    s3, b3 = _fuse_bn(params["bn3"])
    prep = {
        "w1": params["w1"].reshape(planes, cin).T.astype(jnp.bfloat16),
        "w2": jnp.transpose(params["w2"], (2, 3, 1, 0))
                 .reshape(9, planes, planes).astype(jnp.bfloat16),
        "w3": params["w3"].reshape(cout, planes).T.astype(jnp.bfloat16),
        "s1": s1.reshape(1, planes), "b1": b1.reshape(1, planes),
        "s2": s2.reshape(1, planes), "b2": b2.reshape(1, planes),
        "s3": s3.reshape(1, cout), "b3": b3.reshape(1, cout),
    }
    if "wd" in params:
        sd, bd = _fuse_bn(params["bnd"])
        prep["wd"] = params["wd"].reshape(cout, cin).T.astype(jnp.bfloat16)
        prep["sd"] = sd.reshape(1, cout)
        prep["bd"] = bd.reshape(1, cout)
    return prep


def bottleneck_forward_nhwc(x, prep, stride=1):
    """Fused Bottleneck forward on NHWC activations (bf16 out, chainable)."""
    N, H, W, Cin = x.shape
    s = stride
    has_ds = "wd" in prep
    P = prep["w1"].shape[1]
    Cout = prep["w3"].shape[1]
    if not has_ds and (s != 1 or Cin != Cout):
        raise ValueError("identity residual requires stride==1 and Cin==Cout")
    if H % s or W % s:
        raise ValueError("H and W must be divisible by stride")
    Ho, Wo = H // s, W // s
    Wp = (W + 2) // s

    # Spatial zero-pad once and split the padded width into `stride` phases so
    # the kernel only ever does contiguous slicing (replaces the old 9x im2col
    # HBM round trip).
    xp = jnp.pad(x.astype(jnp.bfloat16), ((0, 0), (1, 1), (1, 1), (0, 0)))
    if s == 1:
        xw = xp[:, None]                                        # (N,1,H+2,W+2,C)
    else:
        xw = xp.reshape(N, H + 2, Wp, s, Cin).transpose(0, 3, 1, 2, 4)
    # xw: (N, s, H+2, Wp, Cin) bf16

    def x_spec(dy):
        return pl.BlockSpec((1, s, 1, Wp, Cin),
                            lambda n, oh, dy=dy: (n, 0, s * oh + dy, 0, 0))

    def full_spec(a):
        nd = a.ndim
        return pl.BlockSpec(a.shape, lambda n, oh, nd=nd: (0,) * nd)

    args = [xw, xw, xw,
            prep["w1"], prep["s1"], prep["b1"],
            prep["w2"], prep["s2"], prep["b2"],
            prep["w3"], prep["s3"], prep["b3"]]
    in_specs = [x_spec(0), x_spec(1), x_spec(2)] + [full_spec(a) for a in args[3:]]
    if has_ds:
        extra = [prep["wd"], prep["sd"], prep["bd"]]
        args += extra
        in_specs += [full_spec(a) for a in extra]

    flops = 2 * N * Ho * (3 * s * Wp * Cin * P
                          + 9 * Wo * P * P
                          + Wo * P * Cout
                          + (Wo * Cin * Cout if has_ds else 0))
    bytes_accessed = 3 * int(xw.size) * 2
    bytes_accessed += sum(int(a.size) * a.dtype.itemsize for a in args[3:])
    bytes_accessed += N * Ho * Wo * Cout * 2

    kernel = _make_bottleneck_row_kernel(s, H, W, has_ds)
    out = pl.pallas_call(
        kernel,
        out_shape=jax.ShapeDtypeStruct((N, Ho, Wo, Cout), jnp.bfloat16),
        grid=(N, Ho),
        in_specs=in_specs,
        out_specs=pl.BlockSpec((1, 1, Wo, Cout), lambda n, oh: (n, oh, 0, 0)),
        compiler_params=pltpu.CompilerParams(
            dimension_semantics=("parallel", "parallel"),
            vmem_limit_bytes=_VMEM_LIMIT),
        cost_estimate=pl.CostEstimate(
            flops=int(flops), transcendentals=0,
            bytes_accessed=int(bytes_accessed)),
    )(*args)
    return out


def bottleneck_forward(x_nchw, prep, stride=1):
    """PyTorch-facing wrapper: NCHW f32 in / NCHW f32 out."""
    x = jnp.transpose(x_nchw, (0, 2, 3, 1))
    out = bottleneck_forward_nhwc(x, prep, stride=stride)
    return jnp.transpose(out, (0, 3, 1, 2)).astype(jnp.float32)


# --------------------------- pure-JAX references ---------------------------- #

def _ref_conv(x, w, s, p, dtype=None):
    if dtype is not None:
        x = x.astype(dtype)
        w = w.astype(dtype)
    return lax.conv_general_dilated(
        x, w, (s, s), [(p, p), (p, p)],
        dimension_numbers=("NCHW", "OIHW", "NCHW"),
        preferred_element_type=jnp.float32)


def _ref_bn(x, bnp):
    g, b, m, v = (a[None, :, None, None] for a in bnp)
    return (x - m) / jnp.sqrt(v + EPS) * g + b


def _ref_bn_folded(x, bnp):
    s, b = _fuse_bn(bnp)
    return x * s[None, :, None, None] + b[None, :, None, None]


def _ref_forward_f32(x, params, stride=1):
    """Exact f32 semantics of the PyTorch Bottleneck (eval-mode BN)."""
    out = jax.nn.relu(_ref_bn(_ref_conv(x, params["w1"], 1, 0), params["bn1"]))
    out = jax.nn.relu(_ref_bn(_ref_conv(out, params["w2"], stride, 1), params["bn2"]))
    out = _ref_bn(_ref_conv(out, params["w3"], 1, 0), params["bn3"])
    if "wd" in params:
        residual = _ref_bn(_ref_conv(x, params["wd"], stride, 0), params["bnd"])
    else:
        residual = x
    return jax.nn.relu(out + residual)


def _ref_forward_bf16(x, params, stride=1):
    """Same rounding as the fused kernel (bf16 operands/residual/output)."""
    rb = lambda t: t.astype(jnp.bfloat16).astype(jnp.float32)
    out = rb(jax.nn.relu(_ref_bn_folded(
        _ref_conv(x, params["w1"], 1, 0, jnp.bfloat16), params["bn1"])))
    out = rb(jax.nn.relu(_ref_bn_folded(
        _ref_conv(out, params["w2"], stride, 1, jnp.bfloat16), params["bn2"])))
    out = _ref_bn_folded(
        _ref_conv(out, params["w3"], 1, 0, jnp.bfloat16), params["bn3"])
    if "wd" in params:
        residual = _ref_bn_folded(
            _ref_conv(x, params["wd"], stride, 0, jnp.bfloat16), params["bnd"])
    else:
        residual = rb(x)
    return rb(jax.nn.relu(out + residual))


# ---------------------------------- main ------------------------------------ #

if __name__ == "__main__":
    key = jax.random.PRNGKey(0)

    def bn_params(k, c):
        kk = jax.random.split(k, 4)
        gamma = 1.0 + 0.1 * jax.random.normal(kk[0], (c,), jnp.float32)
        beta = 0.1 * jax.random.normal(kk[1], (c,), jnp.float32)
        mean = 0.1 * jax.random.normal(kk[2], (c,), jnp.float32)
        var = jnp.abs(jax.random.normal(kk[3], (c,), jnp.float32)) + 0.5
        return (gamma, beta, mean, var)

    def make_params(k, inplanes, planes, downsample):
        ks = jax.random.split(k, 8)
        p = {
            "w1": 0.1 * jax.random.normal(ks[0], (planes, inplanes, 1, 1), jnp.float32),
            "w2": 0.1 * jax.random.normal(ks[1], (planes, planes, 3, 3), jnp.float32),
            "w3": 0.1 * jax.random.normal(ks[2], (planes * 4, planes, 1, 1), jnp.float32),
            "bn1": bn_params(ks[3], planes),
            "bn2": bn_params(ks[4], planes),
            "bn3": bn_params(ks[5], planes * 4),
        }
        if downsample:
            p["wd"] = 0.1 * jax.random.normal(
                ks[6], (planes * 4, inplanes, 1, 1), jnp.float32)
            p["bnd"] = bn_params(ks[7], planes * 4)
        return p

    fwd = jax.jit(bottleneck_forward, static_argnames=("stride",))

    N, H, W, planes = 2, 16, 16, 8
    kA, kB, kx1, kx2 = jax.random.split(key, 4)

    # config A: identity residual (stride=1, inplanes == 4*planes), like layer1[1:]
    xA = jax.random.normal(kx1, (N, planes * 4, H, W), jnp.float32)
    pA = make_params(kA, planes * 4, planes, downsample=False)
    prepA = prepare_bottleneck_params(pA)
    outA = jax.block_until_ready(fwd(xA, prepA, stride=1))

    # config B: downsample residual (stride=2, channel change), like layer2[0]
    inplanes_b = 16
    xB = jax.random.normal(kx2, (N, inplanes_b, H, W), jnp.float32)
    pB = make_params(kB, inplanes_b, planes, downsample=True)
    prepB = prepare_bottleneck_params(pB)
    outB = jax.block_until_ready(fwd(xB, prepB, stride=2))

    for x, p, s, out in ((xA, pA, 1, outA), (xB, pB, 2, outB)):
        ref_bf16 = jax.block_until_ready(_ref_forward_bf16(x, p, stride=s))
        ref_f32 = jax.block_until_ready(_ref_forward_f32(x, p, stride=s))
        # tight check vs same-precision (bf16-operand / bf16-output) reference
        np.testing.assert_allclose(np.asarray(out), np.asarray(ref_bf16),
                                   rtol=1e-2, atol=1e-2)
        # semantic check vs pure-f32 reference (bf16-appropriate tolerance)
        np.testing.assert_allclose(np.asarray(out), np.asarray(ref_f32),
                                   rtol=1e-1, atol=1e-1)

    print("KERNEL_OK")
</pallas_src>

<mosaic_0001>
module attributes {stable_mosaic.version = 11 : i64} {
  func.func @kernel(%arg0: i32, %arg1: i32, %arg2: memref<1x1x1x18x32xbf16, #tpu.memory_space<vmem>>, %arg3: memref<1x1x1x18x32xbf16, #tpu.memory_space<vmem>>, %arg4: memref<1x1x1x18x32xbf16, #tpu.memory_space<vmem>>, %arg5: memref<32x8xbf16, #tpu.memory_space<vmem>>, %arg6: memref<1x8xf32, #tpu.memory_space<vmem>>, %arg7: memref<1x8xf32, #tpu.memory_space<vmem>>, %arg8: memref<9x8x8xbf16, #tpu.memory_space<vmem>>, %arg9: memref<1x8xf32, #tpu.memory_space<vmem>>, %arg10: memref<1x8xf32, #tpu.memory_space<vmem>>, %arg11: memref<8x32xbf16, #tpu.memory_space<vmem>>, %arg12: memref<1x32xf32, #tpu.memory_space<vmem>>, %arg13: memref<1x32xf32, #tpu.memory_space<vmem>>, %arg14: memref<1x1x16x32xbf16, #tpu.memory_space<vmem>>) attributes {dimension_semantics = [#tpu.dimension_semantics<parallel>, #tpu.dimension_semantics<parallel>], iteration_bounds = array<i64: 2, 16>, scalar_prefetch = 0 : i64, scratch_operands = 0 : i64, tpu.core_type = #tpu.core_type<tc>, window_params = [{transform_indices = @transform_0, window_bounds = array<i64: 1, 1, 1, 18, 32>}, {transform_indices = @transform_1, window_bounds = array<i64: 1, 1, 1, 18, 32>}, {transform_indices = @transform_2, window_bounds = array<i64: 1, 1, 1, 18, 32>}, {pipeline_mode = #tpu.pipeline_mode<synchronous>, transform_indices = @transform_3, window_bounds = array<i64: 32, 8>}, {pipeline_mode = #tpu.pipeline_mode<synchronous>, transform_indices = @transform_4, window_bounds = array<i64: 1, 8>}, {pipeline_mode = #tpu.pipeline_mode<synchronous>, transform_indices = @transform_5, window_bounds = array<i64: 1, 8>}, {pipeline_mode = #tpu.pipeline_mode<synchronous>, transform_indices = @transform_6, window_bounds = array<i64: 9, 8, 8>}, {pipeline_mode = #tpu.pipeline_mode<synchronous>, transform_indices = @transform_7, window_bounds = array<i64: 1, 8>}, {pipeline_mode = #tpu.pipeline_mode<synchronous>, transform_indices = @transform_8, window_bounds = array<i64: 1, 8>}, {pipeline_mode = #tpu.pipeline_mode<synchronous>, transform_indices = @transform_9, window_bounds = array<i64: 8, 32>}, {pipeline_mode = #tpu.pipeline_mode<synchronous>, transform_indices = @transform_10, window_bounds = array<i64: 1, 32>}, {pipeline_mode = #tpu.pipeline_mode<synchronous>, transform_indices = @transform_11, window_bounds = array<i64: 1, 32>}, {transform_indices = @transform_12, window_bounds = array<i64: 1, 1, 16, 32>}]} {
    %c0 = arith.constant 0 : index
    %c0_0 = arith.constant 0 : index
    %0 = vector.load %arg5[%c0, %c0_0] : memref<32x8xbf16, #tpu.memory_space<vmem>>, vector<32x8xbf16>
    %c0_1 = arith.constant 0 : index
    %c0_2 = arith.constant 0 : index
    %1 = vector.load %arg6[%c0_1, %c0_2] : memref<1x8xf32, #tpu.memory_space<vmem>>, vector<1x8xf32>
    %c0_3 = arith.constant 0 : index
    %c0_4 = arith.constant 0 : index
    %2 = vector.load %arg7[%c0_3, %c0_4] : memref<1x8xf32, #tpu.memory_space<vmem>>, vector<1x8xf32>
    %3 = tpu.iota {dimensions = array<i32: 0>} : vector<18x1xi32>
    %c1_i32 = arith.constant 1 : i32
    %4 = arith.muli %c1_i32, %arg1 : i32
    %c0_i32 = arith.constant 0 : i32
    %5 = arith.addi %4, %c0_i32 : i32
    %c0_i32_5 = arith.constant 0 : i32
    %6 = arith.cmpi eq, %5, %c0_i32_5 : i32
    %c1_i32_6 = arith.constant 1 : i32
    %7 = arith.muli %c1_i32_6, %arg1 : i32
    %c0_i32_7 = arith.constant 0 : i32
    %8 = arith.addi %7, %c0_i32_7 : i32
    %c17_i32 = arith.constant 17 : i32
    %9 = arith.cmpi eq, %8, %c17_i32 : i32
    %10 = arith.ori %6, %9 : i1
    %c0_8 = arith.constant 0 : index
    %c0_9 = arith.constant 0 : index
    %c0_10 = arith.constant 0 : index
    %c0_11 = arith.constant 0 : index
    %c0_12 = arith.constant 0 : index
    %11 = vector.load %arg2[%c0_8, %c0_9, %c0_10, %c0_11, %c0_12] : memref<1x1x1x18x32xbf16, #tpu.memory_space<vmem>>, vector<1x1x1x18x32xbf16>
    %12 = vector.shape_cast %11 : vector<1x1x1x18x32xbf16> to vector<18x32xbf16>
    %cst = arith.constant dense<0.000000e+00> : vector<18x8xf32>
    %13 = tpu.matmul %12, %0, %cst {dimension_numbers = #tpu.dot_dimension_numbers<[1], [0], [0], [1], [0, 0, 1, 1], [], []>} : vector<18x32xbf16>, vector<32x8xbf16>, vector<18x8xf32> -> vector<18x8xf32>
    %14 = vector.broadcast %1 : vector<1x8xf32> to vector<18x8xf32>
    %15 = arith.mulf %13, %14 : vector<18x8xf32>
    %16 = vector.broadcast %2 : vector<1x8xf32> to vector<18x8xf32>
    %17 = arith.addf %15, %16 : vector<18x8xf32>
    %cst_13 = arith.constant 0.000000e+00 : f32
    %18 = vector.broadcast %cst_13 : f32 to vector<18x8xf32>
    %19 = arith.maximumf %17, %18 : vector<18x8xf32>
    %true = arith.constant true
    %20 = arith.xori %10, %true : i1
    %c0_i32_14 = arith.constant 0 : i32
    %21 = vector.broadcast %c0_i32_14 : i32 to vector<18x1xi32>
    %22 = arith.cmpi ne, %3, %21 : vector<18x1xi32>
    %23 = vector.broadcast %20 : i1 to vector<18x1xi1>
    %24 = arith.andi %23, %22 : vector<18x1xi1>
    %c17_i32_15 = arith.constant 17 : i32
    %25 = vector.broadcast %c17_i32_15 : i32 to vector<18x1xi32>
    %26 = arith.cmpi ne, %3, %25 : vector<18x1xi32>
    %27 = arith.andi %24, %26 : vector<18x1xi1>
    %cst_16 = arith.constant 0.000000e+00 : f32
    %28 = vector.shape_cast %27 : vector<18x1xi1> to vector<18x1xi1>
    %29 = vector.broadcast %28 : vector<18x1xi1> to vector<18x8xi1>
    %30 = vector.broadcast %cst_16 : f32 to vector<18x8xf32>
    %31 = arith.select %29, %19, %30 : vector<18x8xi1>, vector<18x8xf32>
    %32 = arith.truncf %31 : vector<18x8xf32> to vector<18x8xbf16>
    %c1_i32_17 = arith.constant 1 : i32
    %33 = arith.muli %c1_i32_17, %arg1 : i32
    %c1_i32_18 = arith.constant 1 : i32
    %34 = arith.addi %33, %c1_i32_18 : i32
    %c0_i32_19 = arith.constant 0 : i32
    %35 = arith.cmpi eq, %34, %c0_i32_19 : i32
    %c1_i32_20 = arith.constant 1 : i32
    %36 = arith.muli %c1_i32_20, %arg1 : i32
    %c1_i32_21 = arith.constant 1 : i32
    %37 = arith.addi %36, %c1_i32_21 : i32
    %c17_i32_22 = arith.constant 17 : i32
    %38 = arith.cmpi eq, %37, %c17_i32_22 : i32
    %39 = arith.ori %35, %38 : i1
    %c0_23 = arith.constant 0 : index
    %c0_24 = arith.constant 0 : index
    %c0_25 = arith.constant 0 : index
    %c0_26 = arith.constant 0 : index
    %c0_27 = arith.constant 0 : index
    %40 = vector.load %arg3[%c0_23, %c0_24, %c0_25, %c0_26, %c0_27] : memref<1x1x1x18x32xbf16, #tpu.memory_space<vmem>>, vector<1x1x1x18x32xbf16>
    %41 = vector.shape_cast %40 : vector<1x1x1x18x32xbf16> to vector<18x32xbf16>
    %cst_28 = arith.constant dense<0.000000e+00> : vector<18x8xf32>
    %42 = tpu.matmul %41, %0, %cst_28 {dimension_numbers = #tpu.dot_dimension_numbers<[1], [0], [0], [1], [0, 0, 1, 1], [], []>} : vector<18x32xbf16>, vector<32x8xbf16>, vector<18x8xf32> -> vector<18x8xf32>
    %43 = vector.broadcast %1 : vector<1x8xf32> to vector<18x8xf32>
    %44 = arith.mulf %42, %43 : vector<18x8xf32>
    %45 = vector.broadcast %2 : vector<1x8xf32> to vector<18x8xf32>
    %46 = arith.addf %44, %45 : vector<18x8xf32>
    %cst_29 = arith.constant 0.000000e+00 : f32
    %47 = vector.broadcast %cst_29 : f32 to vector<18x8xf32>
    %48 = arith.maximumf %46, %47 : vector<18x8xf32>
    %true_30 = arith.constant true
    %49 = arith.xori %39, %true_30 : i1
    %c0_i32_31 = arith.constant 0 : i32
    %50 = vector.broadcast %c0_i32_31 : i32 to vector<18x1xi32>
    %51 = arith.cmpi ne, %3, %50 : vector<18x1xi32>
    %52 = vector.broadcast %49 : i1 to vector<18x1xi1>
    %53 = arith.andi %52, %51 : vector<18x1xi1>
    %c17_i32_32 = arith.constant 17 : i32
    %54 = vector.broadcast %c17_i32_32 : i32 to vector<18x1xi32>
    %55 = arith.cmpi ne, %3, %54 : vector<18x1xi32>
    %56 = arith.andi %53, %55 : vector<18x1xi1>
    %cst_33 = arith.constant 0.000000e+00 : f32
    %57 = vector.shape_cast %56 : vector<18x1xi1> to vector<18x1xi1>
    %58 = vector.broadcast %57 : vector<18x1xi1> to vector<18x8xi1>
    %59 = vector.broadcast %cst_33 : f32 to vector<18x8xf32>
    %60 = arith.select %58, %48, %59 : vector<18x8xi1>, vector<18x8xf32>
    %61 = arith.truncf %60 : vector<18x8xf32> to vector<18x8xbf16>
    %c1_i32_34 = arith.constant 1 : i32
    %62 = arith.muli %c1_i32_34, %arg1 : i32
    %c2_i32 = arith.constant 2 : i32
    %63 = arith.addi %62, %c2_i32 : i32
    %c0_i32_35 = arith.constant 0 : i32
    %64 = arith.cmpi eq, %63, %c0_i32_35 : i32
    %c1_i32_36 = arith.constant 1 : i32
    %65 = arith.muli %c1_i32_36, %arg1 : i32
    %c2_i32_37 = arith.constant 2 : i32
    %66 = arith.addi %65, %c2_i32_37 : i32
    %c17_i32_38 = arith.constant 17 : i32
    %67 = arith.cmpi eq, %66, %c17_i32_38 : i32
    %68 = arith.ori %64, %67 : i1
    %c0_39 = arith.constant 0 : index
    %c0_40 = arith.constant 0 : index
    %c0_41 = arith.constant 0 : index
    %c0_42 = arith.constant 0 : index
    %c0_43 = arith.constant 0 : index
    %69 = vector.load %arg4[%c0_39, %c0_40, %c0_41, %c0_42, %c0_43] : memref<1x1x1x18x32xbf16, #tpu.memory_space<vmem>>, vector<1x1x1x18x32xbf16>
    %70 = vector.shape_cast %69 : vector<1x1x1x18x32xbf16> to vector<18x32xbf16>
    %cst_44 = arith.constant dense<0.000000e+00> : vector<18x8xf32>
    %71 = tpu.matmul %70, %0, %cst_44 {dimension_numbers = #tpu.dot_dimension_numbers<[1], [0], [0], [1], [0, 0, 1, 1], [], []>} : vector<18x32xbf16>, vector<32x8xbf16>, vector<18x8xf32> -> vector<18x8xf32>
    %72 = vector.broadcast %1 : vector<1x8xf32> to vector<18x8xf32>
    %73 = arith.mulf %71, %72 : vector<18x8xf32>
    %74 = vector.broadcast %2 : vector<1x8xf32> to vector<18x8xf32>
    %75 = arith.addf %73, %74 : vector<18x8xf32>
    %cst_45 = arith.constant 0.000000e+00 : f32
    %76 = vector.broadcast %cst_45 : f32 to vector<18x8xf32>
    %77 = arith.maximumf %75, %76 : vector<18x8xf32>
    %true_46 = arith.constant true
    %78 = arith.xori %68, %true_46 : i1
    %c0_i32_47 = arith.constant 0 : i32
    %79 = vector.broadcast %c0_i32_47 : i32 to vector<18x1xi32>
    %80 = arith.cmpi ne, %3, %79 : vector<18x1xi32>
    %81 = vector.broadcast %78 : i1 to vector<18x1xi1>
    %82 = arith.andi %81, %80 : vector<18x1xi1>
    %c17_i32_48 = arith.constant 17 : i32
    %83 = vector.broadcast %c17_i32_48 : i32 to vector<18x1xi32>
    %84 = arith.cmpi ne, %3, %83 : vector<18x1xi32>
    %85 = arith.andi %82, %84 : vector<18x1xi1>
    %cst_49 = arith.constant 0.000000e+00 : f32
    %86 = vector.shape_cast %85 : vector<18x1xi1> to vector<18x1xi1>
    %87 = vector.broadcast %86 : vector<18x1xi1> to vector<18x8xi1>
    %88 = vector.broadcast %cst_49 : f32 to vector<18x8xf32>
    %89 = arith.select %87, %77, %88 : vector<18x8xi1>, vector<18x8xf32>
    %90 = arith.truncf %89 : vector<18x8xf32> to vector<18x8xbf16>
    %cst_50 = arith.constant 0.000000e+00 : f32
    %91 = vector.broadcast %cst_50 : f32 to vector<16x8xf32>
    %92 = vector.extract_strided_slice %32 {offsets = [0, 0], sizes = [16, 8], strides = [1, 1]} : vector<18x8xbf16> to vector<16x8xbf16>
    %c0_51 = arith.constant 0 : index
    %c0_52 = arith.constant 0 : index
    %c0_53 = arith.constant 0 : index
    %93 = vector.load %arg8[%c0_51, %c0_52, %c0_53] : memref<9x8x8xbf16, #tpu.memory_space<vmem>>, vector<1x8x8xbf16>
    %94 = vector.shape_cast %93 : vector<1x8x8xbf16> to vector<8x8xbf16>
    %cst_54 = arith.constant dense<0.000000e+00> : vector<16x8xf32>
    %95 = tpu.matmul %92, %94, %cst_54 {dimension_numbers = #tpu.dot_dimension_numbers<[1], [0], [0], [1], [0, 0, 1, 1], [], []>} : vector<16x8xbf16>, vector<8x8xbf16>, vector<16x8xf32> -> vector<16x8xf32>
    %96 = arith.addf %91, %95 : vector<16x8xf32>
    %97 = vector.extract_strided_slice %32 {offsets = [1, 0], sizes = [16, 8], strides = [1, 1]} : vector<18x8xbf16> to vector<16x8xbf16>
    %c1 = arith.constant 1 : index
    %c0_55 = arith.constant 0 : index
    %c0_56 = arith.constant 0 : index
    %98 = vector.load %arg8[%c1, %c0_55, %c0_56] : memref<9x8x8xbf16, #tpu.memory_space<vmem>>, vector<1x8x8xbf16>
    %99 = vector.shape_cast %98 : vector<1x8x8xbf16> to vector<8x8xbf16>
    %cst_57 = arith.constant dense<0.000000e+00> : vector<16x8xf32>
    %100 = tpu.matmul %97, %99, %cst_57 {dimension_numbers = #tpu.dot_dimension_numbers<[1], [0], [0], [1], [0, 0, 1, 1], [], []>} : vector<16x8xbf16>, vector<8x8xbf16>, vector<16x8xf32> -> vector<16x8xf32>
    %101 = arith.addf %96, %100 : vector<16x8xf32>
    %102 = vector.extract_strided_slice %32 {offsets = [2, 0], sizes = [16, 8], strides = [1, 1]} : vector<18x8xbf16> to vector<16x8xbf16>
    %c2 = arith.constant 2 : index
    %c0_58 = arith.constant 0 : index
    %c0_59 = arith.constant 0 : index
    %103 = vector.load %arg8[%c2, %c0_58, %c0_59] : memref<9x8x8xbf16, #tpu.memory_space<vmem>>, vector<1x8x8xbf16>
    %104 = vector.shape_cast %103 : vector<1x8x8xbf16> to vector<8x8xbf16>
    %cst_60 = arith.constant dense<0.000000e+00> : vector<16x8xf32>
    %105 = tpu.matmul %102, %104, %cst_60 {dimension_numbers = #tpu.dot_dimension_numbers<[1], [0], [0], [1], [0, 0, 1, 1], [], []>} : vector<16x8xbf16>, vector<8x8xbf16>, vector<16x8xf32> -> vector<16x8xf32>
    %106 = arith.addf %101, %105 : vector<16x8xf32>
    %107 = vector.extract_strided_slice %61 {offsets = [0, 0], sizes = [16, 8], strides = [1, 1]} : vector<18x8xbf16> to vector<16x8xbf16>
    %c3 = arith.constant 3 : index
    %c0_61 = arith.constant 0 : index
    %c0_62 = arith.constant 0 : index
    %108 = vector.load %arg8[%c3, %c0_61, %c0_62] : memref<9x8x8xbf16, #tpu.memory_space<vmem>>, vector<1x8x8xbf16>
    %109 = vector.shape_cast %108 : vector<1x8x8xbf16> to vector<8x8xbf16>
    %cst_63 = arith.constant dense<0.000000e+00> : vector<16x8xf32>
    %110 = tpu.matmul %107, %109, %cst_63 {dimension_numbers = #tpu.dot_dimension_numbers<[1], [0], [0], [1], [0, 0, 1, 1], [], []>} : vector<16x8xbf16>, vector<8x8xbf16>, vector<16x8xf32> -> vector<16x8xf32>
    %111 = arith.addf %106, %110 : vector<16x8xf32>
    %112 = vector.extract_strided_slice %61 {offsets = [1, 0], sizes = [16, 8], strides = [1, 1]} : vector<18x8xbf16> to vector<16x8xbf16>
    %c4 = arith.constant 4 : index
    %c0_64 = arith.constant 0 : index
    %c0_65 = arith.constant 0 : index
    %113 = vector.load %arg8[%c4, %c0_64, %c0_65] : memref<9x8x8xbf16, #tpu.memory_space<vmem>>, vector<1x8x8xbf16>
    %114 = vector.shape_cast %113 : vector<1x8x8xbf16> to vector<8x8xbf16>
    %cst_66 = arith.constant dense<0.000000e+00> : vector<16x8xf32>
    %115 = tpu.matmul %112, %114, %cst_66 {dimension_numbers = #tpu.dot_dimension_numbers<[1], [0], [0], [1], [0, 0, 1, 1], [], []>} : vector<16x8xbf16>, vector<8x8xbf16>, vector<16x8xf32> -> vector<16x8xf32>
    %116 = arith.addf %111, %115 : vector<16x8xf32>
    %117 = vector.extract_strided_slice %61 {offsets = [2, 0], sizes = [16, 8], strides = [1, 1]} : vector<18x8xbf16> to vector<16x8xbf16>
    %c5 = arith.constant 5 : index
    %c0_67 = arith.constant 0 : index
    %c0_68 = arith.constant 0 : index
    %118 = vector.load %arg8[%c5, %c0_67, %c0_68] : memref<9x8x8xbf16, #tpu.memory_space<vmem>>, vector<1x8x8xbf16>
    %119 = vector.shape_cast %118 : vector<1x8x8xbf16> to vector<8x8xbf16>
    %cst_69 = arith.constant dense<0.000000e+00> : vector<16x8xf32>
    %120 = tpu.matmul %117, %119, %cst_69 {dimension_numbers = #tpu.dot_dimension_numbers<[1], [0], [0], [1], [0, 0, 1, 1], [], []>} : vector<16x8xbf16>, vector<8x8xbf16>, vector<16x8xf32> -> vector<16x8xf32>
    %121 = arith.addf %116, %120 : vector<16x8xf32>
    %122 = vector.extract_strided_slice %90 {offsets = [0, 0], sizes = [16, 8], strides = [1, 1]} : vector<18x8xbf16> to vector<16x8xbf16>
    %c6 = arith.constant 6 : index
    %c0_70 = arith.constant 0 : index
    %c0_71 = arith.constant 0 : index
    %123 = vector.load %arg8[%c6, %c0_70, %c0_71] : memref<9x8x8xbf16, #tpu.memory_space<vmem>>, vector<1x8x8xbf16>
    %124 = vector.shape_cast %123 : vector<1x8x8xbf16> to vector<8x8xbf16>
    %cst_72 = arith.constant dense<0.000000e+00> : vector<16x8xf32>
    %125 = tpu.matmul %122, %124, %cst_72 {dimension_numbers = #tpu.dot_dimension_numbers<[1], [0], [0], [1], [0, 0, 1, 1], [], []>} : vector<16x8xbf16>, vector<8x8xbf16>, vector<16x8xf32> -> vector<16x8xf32>
    %126 = arith.addf %121, %125 : vector<16x8xf32>
    %127 = vector.extract_strided_slice %90 {offsets = [1, 0], sizes = [16, 8], strides = [1, 1]} : vector<18x8xbf16> to vector<16x8xbf16>
    %c7 = arith.constant 7 : index
    %c0_73 = arith.constant 0 : index
    %c0_74 = arith.constant 0 : index
    %128 = vector.load %arg8[%c7, %c0_73, %c0_74] : memref<9x8x8xbf16, #tpu.memory_space<vmem>>, vector<1x8x8xbf16>
    %129 = vector.shape_cast %128 : vector<1x8x8xbf16> to vector<8x8xbf16>
    %cst_75 = arith.constant dense<0.000000e+00> : vector<16x8xf32>
    %130 = tpu.matmul %127, %129, %cst_75 {dimension_numbers = #tpu.dot_dimension_numbers<[1], [0], [0], [1], [0, 0, 1, 1], [], []>} : vector<16x8xbf16>, vector<8x8xbf16>, vector<16x8xf32> -> vector<16x8xf32>
    %131 = arith.addf %126, %130 : vector<16x8xf32>
    %132 = vector.extract_strided_slice %90 {offsets = [2, 0], sizes = [16, 8], strides = [1, 1]} : vector<18x8xbf16> to vector<16x8xbf16>
    %c8 = arith.constant 8 : index
    %c0_76 = arith.constant 0 : index
    %c0_77 = arith.constant 0 : index
    %133 = vector.load %arg8[%c8, %c0_76, %c0_77] : memref<9x8x8xbf16, #tpu.memory_space<vmem>>, vector<1x8x8xbf16>
    %134 = vector.shape_cast %133 : vector<1x8x8xbf16> to vector<8x8xbf16>
    %cst_78 = arith.constant dense<0.000000e+00> : vector<16x8xf32>
    %135 = tpu.matmul %132, %134, %cst_78 {dimension_numbers = #tpu.dot_dimension_numbers<[1], [0], [0], [1], [0, 0, 1, 1], [], []>} : vector<16x8xbf16>, vector<8x8xbf16>, vector<16x8xf32> -> vector<16x8xf32>
    %136 = arith.addf %131, %135 : vector<16x8xf32>
    %c0_79 = arith.constant 0 : index
    %c0_80 = arith.constant 0 : index
    %137 = vector.load %arg9[%c0_79, %c0_80] : memref<1x8xf32, #tpu.memory_space<vmem>>, vector<1x8xf32>
    %138 = vector.broadcast %137 : vector<1x8xf32> to vector<16x8xf32>
    %139 = arith.mulf %136, %138 : vector<16x8xf32>
    %c0_81 = arith.constant 0 : index
    %c0_82 = arith.constant 0 : index
    %140 = vector.load %arg10[%c0_81, %c0_82] : memref<1x8xf32, #tpu.memory_space<vmem>>, vector<1x8xf32>
    %141 = vector.broadcast %140 : vector<1x8xf32> to vector<16x8xf32>
    %142 = arith.addf %139, %141 : vector<16x8xf32>
    %cst_83 = arith.constant 0.000000e+00 : f32
    %143 = vector.broadcast %cst_83 : f32 to vector<16x8xf32>
    %144 = arith.maximumf %142, %143 : vector<16x8xf32>
    %145 = arith.truncf %144 : vector<16x8xf32> to vector<16x8xbf16>
    %c0_84 = arith.constant 0 : index
    %c0_85 = arith.constant 0 : index
    %146 = vector.load %arg11[%c0_84, %c0_85] : memref<8x32xbf16, #tpu.memory_space<vmem>>, vector<8x32xbf16>
    %cst_86 = arith.constant dense<0.000000e+00> : vector<16x32xf32>
    %147 = tpu.matmul %145, %146, %cst_86 {dimension_numbers = #tpu.dot_dimension_numbers<[1], [0], [0], [1], [0, 0, 1, 1], [], []>} : vector<16x8xbf16>, vector<8x32xbf16>, vector<16x32xf32> -> vector<16x32xf32>
    %c0_87 = arith.constant 0 : index
    %c0_88 = arith.constant 0 : index
    %148 = vector.load %arg12[%c0_87, %c0_88] : memref<1x32xf32, #tpu.memory_space<vmem>>, vector<1x32xf32>
    %149 = vector.broadcast %148 : vector<1x32xf32> to vector<16x32xf32>
    %150 = arith.mulf %147, %149 : vector<16x32xf32>
    %c0_89 = arith.constant 0 : index
    %c0_90 = arith.constant 0 : index
    %151 = vector.load %arg13[%c0_89, %c0_90] : memref<1x32xf32, #tpu.memory_space<vmem>>, vector<1x32xf32>
    %152 = vector.broadcast %151 : vector<1x32xf32> to vector<16x32xf32>
    %153 = arith.addf %150, %152 : vector<16x32xf32>
    %c0_91 = arith.constant 0 : index
    %c0_92 = arith.constant 0 : index
    %c0_93 = arith.constant 0 : index
    %c0_94 = arith.constant 0 : index
    %c0_95 = arith.constant 0 : index
    %154 = vector.load %arg3[%c0_91, %c0_92, %c0_93, %c0_94, %c0_95] : memref<1x1x1x18x32xbf16, #tpu.memory_space<vmem>>, vector<1x1x1x18x32xbf16>
    %155 = vector.shape_cast %154 : vector<1x1x1x18x32xbf16> to vector<18x32xbf16>
    %156 = vector.extract_strided_slice %155 {offsets = [1, 0], sizes = [16, 32], strides = [1, 1]} : vector<18x32xbf16> to vector<16x32xbf16>
    %157 = arith.extf %156 : vector<16x32xbf16> to vector<16x32xf32>
    %158 = arith.addf %153, %157 : vector<16x32xf32>
    %cst_96 = arith.constant 0.000000e+00 : f32
    %159 = vector.broadcast %cst_96 : f32 to vector<16x32xf32>
    %160 = arith.maximumf %158, %159 : vector<16x32xf32>
    %161 = arith.truncf %160 : vector<16x32xf32> to vector<16x32xbf16>
    %c0_97 = arith.constant 0 : index
    %c0_98 = arith.constant 0 : index
    %c0_99 = arith.constant 0 : index
    %c0_100 = arith.constant 0 : index
    %162 = vector.load %arg14[%c0_97, %c0_98, %c0_99, %c0_100] : memref<1x1x16x32xbf16, #tpu.memory_space<vmem>>, vector<1x1x16x32xbf16>
    %163 = vector.shape_cast %162 : vector<1x1x16x32xbf16> to vector<16x32xbf16>
    %164 = vector.shape_cast %161 : vector<16x32xbf16> to vector<1x1x16x32xbf16>
    tpu.vector_store %arg14[%c0_97, %c0_98, %c0_99, %c0_100], %164 {strides = array<i32>} : memref<1x1x16x32xbf16, #tpu.memory_space<vmem>>, vector<1x1x16x32xbf16>,
    return
  }
  func.func @transform_0(%arg0: i32, %arg1: i32) -> (i32, i32, i32, i32, i32) {
    %c1_i32 = arith.constant 1 : i32
    %0 = arith.muli %c1_i32, %arg1 : i32
    %c0_i32 = arith.constant 0 : i32
    %1 = arith.addi %0, %c0_i32 : i32
    %c0_i32_0 = arith.constant 0 : i32
    %c0_i32_1 = arith.constant 0 : i32
    %c0_i32_2 = arith.constant 0 : i32
    %c0_i32_3 = arith.constant 0 : i32
    return %arg0, %c0_i32_0, %1, %c0_i32_1, %c0_i32_2 : i32, i32, i32, i32, i32
  }
  func.func @transform_1(%arg0: i32, %arg1: i32) -> (i32, i32, i32, i32, i32) {
    %c1_i32 = arith.constant 1 : i32
    %0 = arith.muli %c1_i32, %arg1 : i32
    %c1_i32_0 = arith.constant 1 : i32
    %1 = arith.addi %0, %c1_i32_0 : i32
    %c0_i32 = arith.constant 0 : i32
    %c0_i32_1 = arith.constant 0 : i32
    %c0_i32_2 = arith.constant 0 : i32
    %c0_i32_3 = arith.constant 0 : i32
    return %arg0, %c0_i32, %1, %c0_i32_1, %c0_i32_2 : i32, i32, i32, i32, i32
  }
  func.func @transform_2(%arg0: i32, %arg1: i32) -> (i32, i32, i32, i32, i32) {
    %c1_i32 = arith.constant 1 : i32
    %0 = arith.muli %c1_i32, %arg1 : i32
    %c2_i32 = arith.constant 2 : i32
    %1 = arith.addi %0, %c2_i32 : i32
    %c0_i32 = arith.constant 0 : i32
    %c0_i32_0 = arith.constant 0 : i32
    %c0_i32_1 = arith.constant 0 : i32
    %c0_i32_2 = arith.constant 0 : i32
    return %arg0, %c0_i32, %1, %c0_i32_0, %c0_i32_1 : i32, i32, i32, i32, i32
  }
  func.func @transform_3(%arg0: i32, %arg1: i32) -> (i32, i32) {
    %c0_i32 = arith.constant 0 : i32
    %c0_i32_0 = arith.constant 0 : i32
    %c0_i32_1 = arith.constant 0 : i32
    return %c0_i32, %c0_i32_0 : i32, i32
  }
  func.func @transform_4(%arg0: i32, %arg1: i32) -> (i32, i32) {
    %c0_i32 = arith.constant 0 : i32
    %c0_i32_0 = arith.constant 0 : i32
    %c0_i32_1 = arith.constant 0 : i32
    return %c0_i32, %c0_i32_0 : i32, i32
  }
  func.func @transform_5(%arg0: i32, %arg1: i32) -> (i32, i32) {
    %c0_i32 = arith.constant 0 : i32
    %c0_i32_0 = arith.constant 0 : i32
    %c0_i32_1 = arith.constant 0 : i32
    return %c0_i32, %c0_i32_0 : i32, i32
  }
  func.func @transform_6(%arg0: i32, %arg1: i32) -> (i32, i32, i32) {
    %c0_i32 = arith.constant 0 : i32
    %c0_i32_0 = arith.constant 0 : i32
    %c0_i32_1 = arith.constant 0 : i32
    %c0_i32_2 = arith.constant 0 : i32
    return %c0_i32, %c0_i32_0, %c0_i32_1 : i32, i32, i32
  }
  func.func @transform_7(%arg0: i32, %arg1: i32) -> (i32, i32) {
    %c0_i32 = arith.constant 0 : i32
    %c0_i32_0 = arith.constant 0 : i32
    %c0_i32_1 = arith.constant 0 : i32
    return %c0_i32, %c0_i32_0 : i32, i32
  }
  func.func @transform_8(%arg0: i32, %arg1: i32) -> (i32, i32) {
    %c0_i32 = arith.constant 0 : i32
    %c0_i32_0 = arith.constant 0 : i32
    %c0_i32_1 = arith.constant 0 : i32
    return %c0_i32, %c0_i32_0 : i32, i32
  }
  func.func @transform_9(%arg0: i32, %arg1: i32) -> (i32, i32) {
    %c0_i32 = arith.constant 0 : i32
    %c0_i32_0 = arith.constant 0 : i32
    %c0_i32_1 = arith.constant 0 : i32
    return %c0_i32, %c0_i32_0 : i32, i32
  }
  func.func @transform_10(%arg0: i32, %arg1: i32) -> (i32, i32) {
    %c0_i32 = arith.constant 0 : i32
    %c0_i32_0 = arith.constant 0 : i32
    %c0_i32_1 = arith.constant 0 : i32
    return %c0_i32, %c0_i32_0 : i32, i32
  }
  func.func @transform_11(%arg0: i32, %arg1: i32) -> (i32, i32) {
    %c0_i32 = arith.constant 0 : i32
    %c0_i32_0 = arith.constant 0 : i32
    %c0_i32_1 = arith.constant 0 : i32
    return %c0_i32, %c0_i32_0 : i32, i32
  }
  func.func @transform_12(%arg0: i32, %arg1: i32) -> (i32, i32, i32, i32) {
    %c0_i32 = arith.constant 0 : i32
    %c0_i32_0 = arith.constant 0 : i32
    %c0_i32_1 = arith.constant 0 : i32
    return %arg0, %arg1, %c0_i32, %c0_i32_0 : i32, i32, i32, i32
  }
}

</mosaic_0001>

<llo_original>
// kernel: bottleneck_forward.1
$region0: #{bottleneck_forward.1}
  #allocation0 [shape = 'u32[]', space=smem, size = 0x4, offset = 0x4, fixed_abs, tag = 'smem constant byte address 0x4 - core index']
  #allocation1 [shape = 'u32[144,128]{1,0:T(1,128)}', space=vmem, size = 0x12000, scoped, tag = 'internal scratch']
  %s0 = inlined_call_operand.vmem [shape: bf16[2,1,18,18,32], index: 0, kind: input, shape index: {}, may-alias: {0,1,2}]
  %s1 = inlined_call_operand.vmem [shape: bf16[2,1,18,18,32], index: 1, kind: input, shape index: {}, may-alias: {0,1,2}]
  %s2 = inlined_call_operand.vmem [shape: bf16[2,1,18,18,32], index: 2, kind: input, shape index: {}, may-alias: {0,1,2}]
  %s3 = inlined_call_operand.vmem [shape: bf16[32,8], index: 3, kind: input, shape index: {}]
  %s4 = inlined_call_operand.vmem [shape: f32[1,8], index: 4, kind: input, shape index: {}]
  %s5 = inlined_call_operand.vmem [shape: f32[1,8], index: 5, kind: input, shape index: {}]
  %s6 = inlined_call_operand.vmem [shape: bf16[9,8,8], index: 6, kind: input, shape index: {}]
  %s7 = inlined_call_operand.vmem [shape: f32[1,8], index: 7, kind: input, shape index: {}]
  %s8 = inlined_call_operand.vmem [shape: f32[1,8], index: 8, kind: input, shape index: {}]
  %s9 = inlined_call_operand.vmem [shape: bf16[8,32], index: 9, kind: input, shape index: {}]
  %s10 = inlined_call_operand.vmem [shape: f32[1,32], index: 10, kind: input, shape index: {}]
  %s11 = inlined_call_operand.vmem [shape: f32[1,32], index: 11, kind: input, shape index: {}]
  %s12 = inlined_call_operand.vmem [shape: bf16[2,16,16,32], index: 12, kind: output, shape index: {}]
  %s13 = sld [smem:[#allocation0]]
  $region81: #{bottleneck_forward.1} parent=0
    _
  %s15 = ssub.s32 1, %s13
  %s16 = scalar_select 0, %s15, %s13
  loop: start=0, step=1, limit=34
  $region2: #{bottleneck_forward.1} parent=0 // loop_pre_header
    _
  $region3: #{bottleneck_forward.1} parent=0 // loop_header
    %s18 = sphi 0, %s22
    %p19 = scmp.ge.s32.totalorder %s18, 34
    %s25 = sphi 0, %s37
    %s26 = sphi 0, %s33
    %s27 = sphi 0, %s25
    %s28 = sphi 0, %s26
    %s29 = sphi 0, %s27
    %s30 = sphi 0, %s28
    %s42 = sphi 0, %s44
    %s45 = sphi 0, %s42
    %s46 = sphi 0, %s45
    %s62 = sphi 0, %s46
    %s72 = sphi 0, %s74
    %s75 = sphi 0, %s72
    %s76 = sphi 0, %s75
    %s92 = sphi 0, %s76
    %s102 = sphi 0, %s104
    %s105 = sphi 0, %s102
    %s106 = sphi 0, %s105
    %s122 = sphi 0, %s106
    %s126 = sphi 0, %s126
    %s128 = sphi 0, %s126
    %s129 = sphi 0, %s128
    %s143 = sphi 0, %s129
    %s147 = sphi 0, %s147
    %s149 = sphi 0, %s147
    %s150 = sphi 0, %s149
    %s164 = sphi 0, %s150
    %s168 = sphi 0, %s168
    %s170 = sphi 0, %s168
    %s171 = sphi 0, %s170
    %s185 = sphi 0, %s171
    %s189 = sphi 0, %s189
    %s191 = sphi 0, %s189
    %s192 = sphi 0, %s191
    %s206 = sphi 0, %s192
    %s210 = sphi 0, %s210
    %s212 = sphi 0, %s210
    %s213 = sphi 0, %s212
    %s227 = sphi 0, %s213
    %s231 = sphi 0, %s231
    %s233 = sphi 0, %s231
    %s234 = sphi 0, %s233
    %s248 = sphi 0, %s234
    %s252 = sphi 0, %s252
    %s254 = sphi 0, %s252
    %s255 = sphi 0, %s254
    %s269 = sphi 0, %s255
    %s273 = sphi 0, %s273
    %s275 = sphi 0, %s273
    %s276 = sphi 0, %s275
    %s290 = sphi 0, %s276
    %s294 = sphi 0, %s294
    %s296 = sphi 0, %s294
    %s297 = sphi 0, %s296
    %s311 = sphi 0, %s297
    %s319 = sphi 0, %s321
    %s322 = sphi 0, %s319
    %s323 = sphi 0, %s322
    %s339 = sphi 0, %s323
  $region4: #{bottleneck_forward.1} parent=0 // loop_header_branch
    %21 = sbr.rel (%p19) target = $region8
  $region5: #{bottleneck_forward.1} parent=0 // loop_body
    %s23 = ssub.s32 %s18, 1
    %s24 = ssub.s32 %s18, 2
    %s31 = sadd.s32 1, %s26
    %p32 = scmp.ge.s32.totalorder %s31, 16
    %s33 = scalar_select %p32, 0, %s31
    %s34 = sadd.s32 1, %s25
    %s35 = scalar_select %p32, %s34, %s25
    %p36 = scmp.ge.s32.totalorder %s35, 2
    %s37 = scalar_select %p36, 0, %s35
    %s38 = ssub.s32 %s25, %s37
    %s39 = ssub.s32 %s26, %s33
    %s40 = sor.u32 %s38, %s39
    %p41 = scmp.eq.s32.totalorder %s40, 0
    %s43 = sadd.s32 %s42, 1
    %s44 = scalar_select %p41, %s42, %s43
    %p47 = pneg %p41
    %p48 = scmp.eq.s32.totalorder %s18, 31
    %p49 = por %p47, %p48
    %p50 = scmp.ne.s32.totalorder %s42, %s45
    %p51 = scmp.eq.s32.totalorder %s18, 0
    %p52 = por %p50, %p51
    %p53 = scmp.ne.s32.totalorder %s42, %s45
    %p54 = scmp.eq.s32.totalorder %s23, 31
    %p55 = por %p53, %p54
    %p56 = scmp.ne.s32.totalorder %s45, %s46
    %p57 = scmp.eq.s32.totalorder %s23, 0
    %p58 = por %p56, %p57
    %p59 = scmp.ne.s32.totalorder %s45, %s46
    %p60 = scmp.eq.s32.totalorder %s24, 31
    %p61 = por %p59, %p60
    %p63 = scmp.ne.s32.totalorder %s46, %s62
    %p64 = scmp.eq.s32.totalorder %s24, 0
    %p65 = por %p63, %p64
    %s66 = sadd.s32 %s26, 1
    %s67 = sadd.s32 %s33, 1
    %s68 = ssub.s32 %s25, %s37
    %s69 = ssub.s32 %s66, %s67
    %s70 = sor.u32 %s68, %s69
    %p71 = scmp.eq.s32.totalorder %s70, 0
    %s73 = sadd.s32 %s72, 1
    %s74 = scalar_select %p71, %s72, %s73
    %p77 = pneg %p71
    %p78 = scmp.eq.s32.totalorder %s18, 31
    %p79 = por %p77, %p78
    %p80 = scmp.ne.s32.totalorder %s72, %s75
    %p81 = scmp.eq.s32.totalorder %s18, 0
    %p82 = por %p80, %p81
    %p83 = scmp.ne.s32.totalorder %s72, %s75
    %p84 = scmp.eq.s32.totalorder %s23, 31
    %p85 = por %p83, %p84
    %p86 = scmp.ne.s32.totalorder %s75, %s76
    %p87 = scmp.eq.s32.totalorder %s23, 0
    %p88 = por %p86, %p87
    %p89 = scmp.ne.s32.totalorder %s75, %s76
    %p90 = scmp.eq.s32.totalorder %s24, 31
    %p91 = por %p89, %p90
    %p93 = scmp.ne.s32.totalorder %s76, %s92
    %p94 = scmp.eq.s32.totalorder %s24, 0
    %p95 = por %p93, %p94
    %s96 = sadd.s32 %s26, 2
    %s97 = sadd.s32 %s33, 2
    %s98 = ssub.s32 %s25, %s37
    %s99 = ssub.s32 %s96, %s97
    %s100 = sor.u32 %s98, %s99
    %p101 = scmp.eq.s32.totalorder %s100, 0
    %s103 = sadd.s32 %s102, 1
    %s104 = scalar_select %p101, %s102, %s103
    %p107 = pneg %p101
    %p108 = scmp.eq.s32.totalorder %s18, 31
    %p109 = por %p107, %p108
    %p110 = scmp.ne.s32.totalorder %s102, %s105
    %p111 = scmp.eq.s32.totalorder %s18, 0
    %p112 = por %p110, %p111
    %p113 = scmp.ne.s32.totalorder %s102, %s105
    %p114 = scmp.eq.s32.totalorder %s23, 31
    %p115 = por %p113, %p114
    %p116 = scmp.ne.s32.totalorder %s105, %s106
    %p117 = scmp.eq.s32.totalorder %s23, 0
    %p118 = por %p116, %p117
    %p119 = scmp.ne.s32.totalorder %s105, %s106
    %p120 = scmp.eq.s32.totalorder %s24, 31
    %p121 = por %p119, %p120
    %p123 = scmp.ne.s32.totalorder %s106, %s122
    %p124 = scmp.eq.s32.totalorder %s24, 0
    %p125 = por %p123, %p124
    %s127 = sadd.s32 %s126, 1
    %p130 = scmp.eq.s32.totalorder %s18, 31
    %p131 = scmp.ne.s32.totalorder %s126, %s128
    %p132 = scmp.eq.s32.totalorder %s18, 0
    %p133 = por %p131, %p132
    %p134 = scmp.ne.s32.totalorder %s126, %s128
    %p135 = scmp.eq.s32.totalorder %s23, 31
    %p136 = por %p134, %p135
    %p137 = scmp.ne.s32.totalorder %s128, %s129
    %p138 = scmp.eq.s32.totalorder %s23, 0
    %p139 = por %p137, %p138
    %p140 = scmp.ne.s32.totalorder %s128, %s129
    %p141 = scmp.eq.s32.totalorder %s24, 31
    %p142 = por %p140, %p141
    %p144 = scmp.ne.s32.totalorder %s129, %s143
    %p145 = scmp.eq.s32.totalorder %s24, 0
    %p146 = por %p144, %p145
    %s148 = sadd.s32 %s147, 1
    %p151 = scmp.eq.s32.totalorder %s18, 31
    %p152 = scmp.ne.s32.totalorder %s147, %s149
    %p153 = scmp.eq.s32.totalorder %s18, 0
    %p154 = por %p152, %p153
    %p155 = scmp.ne.s32.totalorder %s147, %s149
    %p156 = scmp.eq.s32.totalorder %s23, 31
    %p157 = por %p155, %p156
    %p158 = scmp.ne.s32.totalorder %s149, %s150
    %p159 = scmp.eq.s32.totalorder %s23, 0
    %p160 = por %p158, %p159
    %p161 = scmp.ne.s32.totalorder %s149, %s150
    %p162 = scmp.eq.s32.totalorder %s24, 31
    %p163 = por %p161, %p162
    %p165 = scmp.ne.s32.totalorder %s150, %s164
    %p166 = scmp.eq.s32.totalorder %s24, 0
    %p167 = por %p165, %p166
    %s169 = sadd.s32 %s168, 1
    %p172 = scmp.eq.s32.totalorder %s18, 31
    %p173 = scmp.ne.s32.totalorder %s168, %s170
    %p174 = scmp.eq.s32.totalorder %s18, 0
    %p175 = por %p173, %p174
    %p176 = scmp.ne.s32.totalorder %s168, %s170
    %p177 = scmp.eq.s32.totalorder %s23, 31
    %p178 = por %p176, %p177
    %p179 = scmp.ne.s32.totalorder %s170, %s171
    %p180 = scmp.eq.s32.totalorder %s23, 0
    %p181 = por %p179, %p180
    %p182 = scmp.ne.s32.totalorder %s170, %s171
    %p183 = scmp.eq.s32.totalorder %s24, 31
    %p184 = por %p182, %p183
    %p186 = scmp.ne.s32.totalorder %s171, %s185
    %p187 = scmp.eq.s32.totalorder %s24, 0
    %p188 = por %p186, %p187
    %s190 = sadd.s32 %s189, 1
    %p193 = scmp.eq.s32.totalorder %s18, 31
    %p194 = scmp.ne.s32.totalorder %s189, %s191
    %p195 = scmp.eq.s32.totalorder %s18, 0
    %p196 = por %p194, %p195
    %p197 = scmp.ne.s32.totalorder %s189, %s191
    %p198 = scmp.eq.s32.totalorder %s23, 31
    %p199 = por %p197, %p198
    %p200 = scmp.ne.s32.totalorder %s191, %s192
    %p201 = scmp.eq.s32.totalorder %s23, 0
    %p202 = por %p200, %p201
    %p203 = scmp.ne.s32.totalorder %s191, %s192
    %p204 = scmp.eq.s32.totalorder %s24, 31
    %p205 = por %p203, %p204
    %p207 = scmp.ne.s32.totalorder %s192, %s206
    %p208 = scmp.eq.s32.totalorder %s24, 0
    %p209 = por %p207, %p208
    %s211 = sadd.s32 %s210, 1
    %p214 = scmp.eq.s32.totalorder %s18, 31
    %p215 = scmp.ne.s32.totalorder %s210, %s212
    %p216 = scmp.eq.s32.totalorder %s18, 0
    %p217 = por %p215, %p216
    %p218 = scmp.ne.s32.totalorder %s210, %s212
    %p219 = scmp.eq.s32.totalorder %s23, 31
    %p220 = por %p218, %p219
    %p221 = scmp.ne.s32.totalorder %s212, %s213
    %p222 = scmp.eq.s32.totalorder %s23, 0
    %p223 = por %p221, %p222
    %p224 = scmp.ne.s32.totalorder %s212, %s213
    %p225 = scmp.eq.s32.totalorder %s24, 31
    %p226 = por %p224, %p225
    %p228 = scmp.ne.s32.totalorder %s213, %s227
    %p229 = scmp.eq.s32.totalorder %s24, 0
    %p230 = por %p228, %p229
    %s232 = sadd.s32 %s231, 1
    %p235 = scmp.eq.s32.totalorder %s18, 31
    %p236 = scmp.ne.s32.totalorder %s231, %s233
    %p237 = scmp.eq.s32.totalorder %s18, 0
    %p238 = por %p236, %p237
    %p239 = scmp.ne.s32.totalorder %s231, %s233
    %p240 = scmp.eq.s32.totalorder %s23, 31
    %p241 = por %p239, %p240
    %p242 = scmp.ne.s32.totalorder %s233, %s234
    %p243 = scmp.eq.s32.totalorder %s23, 0
    %p244 = por %p242, %p243
    %p245 = scmp.ne.s32.totalorder %s233, %s234
    %p246 = scmp.eq.s32.totalorder %s24, 31
    %p247 = por %p245, %p246
    %p249 = scmp.ne.s32.totalorder %s234, %s248
    %p250 = scmp.eq.s32.totalorder %s24, 0
    %p251 = por %p249, %p250
    %s253 = sadd.s32 %s252, 1
    %p256 = scmp.eq.s32.totalorder %s18, 31
    %p257 = scmp.ne.s32.totalorder %s252, %s254
    %p258 = scmp.eq.s32.totalorder %s18, 0
    %p259 = por %p257, %p258
    %p260 = scmp.ne.s32.totalorder %s252, %s254
    %p261 = scmp.eq.s32.totalorder %s23, 31
    %p262 = por %p260, %p261
    %p263 = scmp.ne.s32.totalorder %s254, %s255
    %p264 = scmp.eq.s32.totalorder %s23, 0
    %p265 = por %p263, %p264
    %p266 = scmp.ne.s32.totalorder %s254, %s255
    %p267 = scmp.eq.s32.totalorder %s24, 31
    %p268 = por %p266, %p267
    %p270 = scmp.ne.s32.totalorder %s255, %s269
    %p271 = scmp.eq.s32.totalorder %s24, 0
    %p272 = por %p270, %p271
    %s274 = sadd.s32 %s273, 1
    %p277 = scmp.eq.s32.totalorder %s18, 31
    %p278 = scmp.ne.s32.totalorder %s273, %s275
    %p279 = scmp.eq.s32.totalorder %s18, 0
    %p280 = por %p278, %p279
    %p281 = scmp.ne.s32.totalorder %s273, %s275
    %p282 = scmp.eq.s32.totalorder %s23, 31
    %p283 = por %p281, %p282
    %p284 = scmp.ne.s32.totalorder %s275, %s276
    %p285 = scmp.eq.s32.totalorder %s23, 0
    %p286 = por %p284, %p285
    %p287 = scmp.ne.s32.totalorder %s275, %s276
    %p288 = scmp.eq.s32.totalorder %s24, 31
    %p289 = por %p287, %p288
    %p291 = scmp.ne.s32.totalorder %s276, %s290
    %p292 = scmp.eq.s32.totalorder %s24, 0
    %p293 = por %p291, %p292
    %s295 = sadd.s32 %s294, 1
    %p298 = scmp.eq.s32.totalorder %s18, 31
    %p299 = scmp.ne.s32.totalorder %s294, %s296
    %p300 = scmp.eq.s32.totalorder %s18, 0
    %p301 = por %p299, %p300
    %p302 = scmp.ne.s32.totalorder %s294, %s296
    %p303 = scmp.eq.s32.totalorder %s23, 31
    %p304 = por %p302, %p303
    %p305 = scmp.ne.s32.totalorder %s296, %s297
    %p306 = scmp.eq.s32.totalorder %s23, 0
    %p307 = por %p305, %p306
    %p308 = scmp.ne.s32.totalorder %s296, %s297
    %p309 = scmp.eq.s32.totalorder %s24, 31
    %p310 = por %p308, %p309
    %p312 = scmp.ne.s32.totalorder %s297, %s311
    %p313 = scmp.eq.s32.totalorder %s24, 0
    %p314 = por %p312, %p313
    %s315 = ssub.s32 %s25, %s37
    %s316 = ssub.s32 %s26, %s33
    %s317 = sor.u32 %s315, %s316
    %p318 = scmp.eq.s32.totalorder %s317, 0
    %s320 = sadd.s32 %s319, 1
    %s321 = scalar_select %p318, %s319, %s320
    %p324 = pneg %p318
    %p325 = scmp.eq.s32.totalorder %s18, 31
    %p326 = por %p324, %p325
    %p327 = scmp.ne.s32.totalorder %s319, %s322
    %p328 = scmp.eq.s32.totalorder %s18, 0
    %p329 = por %p327, %p328
    %p330 = scmp.ne.s32.totalorder %s319, %s322
    %p331 = scmp.eq.s32.totalorder %s23, 31
    %p332 = por %p330, %p331
    %p333 = scmp.ne.s32.totalorder %s322, %s323
    %p334 = scmp.eq.s32.totalorder %s23, 0
    %p335 = por %p333, %p334
    %p336 = scmp.ne.s32.totalorder %s322, %s323
    %p337 = scmp.eq.s32.totalorder %s24, 31
    %p338 = por %p336, %p337
    %p340 = scmp.ne.s32.totalorder %s323, %s339
    %p341 = scmp.eq.s32.totalorder %s24, 0
    %p342 = por %p340, %p341
    %p343 = scmp.le.s32.totalorder 1, %s18
    %p344 = scmp.lt.s32.totalorder %s18, 33
    %p345 = pnand %p343, %p344
    %p346 = pneg %p345
    // Predicated region
    $region9: #{bottleneck_forward.1} parent=5 // pred_check
      _
    $region10: #{bottleneck_forward.1} parent=5 // pred_check_branch
      %348 = sbr.rel (%p345) target = $region12
    $region11: #{bottleneck_forward.1} parent=5 // pred_region
      %s349 = ssub.s32 %s18, 1
      // Predicated region
      $region13: #{bottleneck_forward.1} parent=11 // pred_check
        %p350 = pneg %p139
      $region14: #{bottleneck_forward.1} parent=11 // pred_check_branch
        %352 = sbr.rel (%p350) target = $region16
      $region15: #{bottleneck_forward.1} parent=11 // pred_region
        _
      $region16: #{bottleneck_forward.1} parent=11 // pred_fallthru
        _
      // Predicated region
      $region17: #{bottleneck_forward.1} parent=11 // pred_check
        %p353 = pneg %p160
      $region18: #{bottleneck_forward.1} parent=11 // pred_check_branch
        %355 = sbr.rel (%p353) target = $region20
      $region19: #{bottleneck_forward.1} parent=11 // pred_region
        _
      $region20: #{bottleneck_forward.1} parent=11 // pred_fallthru
        _
      // Predicated region
      $region21: #{bottleneck_forward.1} parent=11 // pred_check
        %p356 = pneg %p181
      $region22: #{bottleneck_forward.1} parent=11 // pred_check_branch
        %358 = sbr.rel (%p356) target = $region24
      $region23: #{bottleneck_forward.1} parent=11 // pred_region
        _
      $region24: #{bottleneck_forward.1} parent=11 // pred_fallthru
        _
      // Predicated region
      $region25: #{bottleneck_forward.1} parent=11 // pred_check
        %p359 = pneg %p202
      $region26: #{bottleneck_forward.1} parent=11 // pred_check_branch
        %361 = sbr.rel (%p359) target = $region28
      $region27: #{bottleneck_forward.1} parent=11 // pred_region
        _
      $region28: #{bottleneck_forward.1} parent=11 // pred_fallthru
        _
      // Predicated region
      $region29: #{bottleneck_forward.1} parent=11 // pred_check
        %p362 = pneg %p223
      $region30: #{bottleneck_forward.1} parent=11 // pred_check_branch
        %364 = sbr.rel (%p362) target = $region32
      $region31: #{bottleneck_forward.1} parent=11 // pred_region
        _
      $region32: #{bottleneck_forward.1} parent=11 // pred_fallthru
        _
      // Predicated region
      $region33: #{bottleneck_forward.1} parent=11 // pred_check
        %p365 = pneg %p244
      $region34: #{bottleneck_forward.1} parent=11 // pred_check_branch
        %367 = sbr.rel (%p365) target = $region36
      $region35: #{bottleneck_forward.1} parent=11 // pred_region
        _
      $region36: #{bottleneck_forward.1} parent=11 // pred_fallthru
        _
      // Predicated region
      $region37: #{bottleneck_forward.1} parent=11 // pred_check
        %p368 = pneg %p265
      $region38: #{bottleneck_forward.1} parent=11 // pred_check_branch
        %370 = sbr.rel (%p368) target = $region40
      $region39: #{bottleneck_forward.1} parent=11 // pred_region
        _
      $region40: #{bottleneck_forward.1} parent=11 // pred_fallthru
        _
      // Predicated region
      $region41: #{bottleneck_forward.1} parent=11 // pred_check
        %p371 = pneg %p286
      $region42: #{bottleneck_forward.1} parent=11 // pred_check_branch
        %373 = sbr.rel (%p371) target = $region44
      $region43: #{bottleneck_forward.1} parent=11 // pred_region
        _
      $region44: #{bottleneck_forward.1} parent=11 // pred_fallthru
        _
      // Predicated region
      $region45: #{bottleneck_forward.1} parent=11 // pred_check
        %p374 = pneg %p307
      $region46: #{bottleneck_forward.1} parent=11 // pred_check_branch
        %376 = sbr.rel (%p374) target = $region48
      $region47: #{bottleneck_forward.1} parent=11 // pred_region
        _
      $region48: #{bottleneck_forward.1} parent=11 // pred_fallthru
        _
    $region12: #{bottleneck_forward.1} parent=5 // pred_fallthru
      _
    %p377 = scmp.lt.s32.totalorder %s18, 32
    // Predicated region
    $region49: #{bottleneck_forward.1} parent=5 // pred_check
      %p378 = pneg %p377
    $region50: #{bottleneck_forward.1} parent=5 // pred_check_branch
      %380 = sbr.rel (%p378) target = $region52
    $region51: #{bottleneck_forward.1} parent=5 // pred_region
      // Predicated region
      $region53: #{bottleneck_forward.1} parent=51 // pred_check
        %p381 = pneg %p52
      $region54: #{bottleneck_forward.1} parent=51 // pred_check_branch
        %383 = sbr.rel (%p381) target = $region56
      $region55: #{bottleneck_forward.1} parent=51 // pred_region
        %p384 = scmp.lt.s32.totalorder %s25, 1
        %s385 = scalar_select %p384, %s25, 1
        %p386 = scmp.lt.s32.totalorder %s26, 17
        %s387 = scalar_select %p386, %s26, 17
        %s388 = smul.addr %s387, 3
        %s389 = smul.addr %s385, 54
        %s390 = sadd.s32 %s388, %s389
        %s391 = smul.addr %s390, 4
        %s392 = scalar_lea.vmem %s0, %s391
      $region56: #{bottleneck_forward.1} parent=51 // pred_fallthru
        _
      // Predicated region
      $region57: #{bottleneck_forward.1} parent=51 // pred_check
        %p393 = pneg %p82
      $region58: #{bottleneck_forward.1} parent=51 // pred_check_branch
        %395 = sbr.rel (%p393) target = $region60
      $region59: #{bottleneck_forward.1} parent=51 // pred_region
        %s396 = sadd.s32 %s26, 1
        %p397 = scmp.lt.s32.totalorder %s25, 1
        %s398 = scalar_select %p397, %s25, 1
        %p399 = scmp.lt.s32.totalorder %s396, 17
        %s400 = scalar_select %p399, %s396, 17
        %s401 = smul.addr %s400, 3
        %s402 = smul.addr %s398, 54
        %s403 = sadd.s32 %s401, %s402
        %s404 = smul.addr %s403, 4
        %s405 = scalar_lea.vmem %s1, %s404
        %s406 = sadd.s32 %s26, 1
      $region60: #{bottleneck_forward.1} parent=51 // pred_fallthru
        _
      // Predicated region
      $region61: #{bottleneck_forward.1} parent=51 // pred_check
        %p407 = pneg %p112
      $region62: #{bottleneck_forward.1} parent=51 // pred_check_branch
        %409 = sbr.rel (%p407) target = $region64
      $region63: #{bottleneck_forward.1} parent=51 // pred_region
        %s410 = sadd.s32 %s26, 2
        %p411 = scmp.lt.s32.totalorder %s25, 1
        %s412 = scalar_select %p411, %s25, 1
        %p413 = scmp.lt.s32.totalorder %s410, 17
        %s414 = scalar_select %p413, %s410, 17
        %s415 = smul.addr %s414, 3
        %s416 = smul.addr %s412, 54
        %s417 = sadd.s32 %s415, %s416
        %s418 = smul.addr %s417, 4
        %s419 = scalar_lea.vmem %s2, %s418
        %s420 = sadd.s32 %s26, 2
      $region64: #{bottleneck_forward.1} parent=51 // pred_fallthru
        _
    $region52: #{bottleneck_forward.1} parent=5 // pred_fallthru
      _
    %p421 = scmp.le.s32.totalorder 1, %s18
    %p422 = scmp.lt.s32.totalorder %s18, 33
    %p423 = pnand %p421, %p422
    %p424 = pneg %p423
    // Predicated region
    $region65: #{bottleneck_forward.1} parent=5 // pred_check
      _
    $region66: #{bottleneck_forward.1} parent=5 // pred_check_branch
      %426 = sbr.rel (%p423) target = $region68
    $region67: #{bottleneck_forward.1} parent=5 // pred_region
      %s427 = ssub.s32 %s18, 1
      %p428 = scmp.lt.s32.totalorder %s27, 1
      %s429 = scalar_select %p428, %s27, 1
      %p430 = scmp.lt.s32.totalorder %s28, 17
      %s431 = scalar_select %p430, %s28, 17
      %s432 = smul.addr %s431, 3
      %s433 = smul.addr %s429, 54
      %s434 = sadd.s32 %s432, %s433
      %s435 = smul.addr %s434, 4
      %s436 = scalar_lea.vmem %s0, %s435
      %p437 = pneg %p58
      %p438 = pneg %p55
      %s439 = sadd.s32 %s28, 1
      %p440 = scmp.lt.s32.totalorder %s27, 1
      %s441 = scalar_select %p440, %s27, 1
      %p442 = scmp.lt.s32.totalorder %s439, 17
      %s443 = scalar_select %p442, %s439, 17
      %s444 = smul.addr %s443, 3
      %s445 = smul.addr %s441, 54
      %s446 = sadd.s32 %s444, %s445
      %s447 = smul.addr %s446, 4
      %s448 = scalar_lea.vmem %s1, %s447
      %p449 = pneg %p88
      %p450 = pneg %p85
      %s451 = sadd.s32 %s28, 2
      %p452 = scmp.lt.s32.totalorder %s27, 1
      %s453 = scalar_select %p452, %s27, 1
      %p454 = scmp.lt.s32.totalorder %s451, 17
      %s455 = scalar_select %p454, %s451, 17
      %s456 = smul.addr %s455, 3
      %s457 = smul.addr %s453, 54
      %s458 = sadd.s32 %s456, %s457
      %s459 = smul.addr %s458, 4
      %s460 = scalar_lea.vmem %s2, %s459
      %p461 = pneg %p118
      %p462 = pneg %p115
      %p463 = pneg %p139
      %p464 = pneg %p136
      %p465 = pneg %p160
      %p466 = pneg %p157
      %p467 = pneg %p181
      %p468 = pneg %p178
      %p469 = pneg %p202
      %p470 = pneg %p199
      %p471 = pneg %p223
      %p472 = pneg %p220
      %p473 = pneg %p244
      %p474 = pneg %p241
      %p475 = pneg %p265
      %p476 = pneg %p262
      %p477 = pneg %p286
      %p478 = pneg %p283
      %p479 = pneg %p307
      %p480 = pneg %p304
      %p481 = pneg %p335
      %p482 = pneg %p332
      %p483 = scmp.lt.s32.totalorder %s27, 1
      %s484 = scalar_select %p483, %s27, 1
      %p485 = scmp.lt.s32.totalorder %s28, 15
      %s486 = scalar_select %p485, %s28, 15
      %s487 = smul.addr %s486, 2
      %s488 = smul.addr %s484, 32
      %s489 = sadd.s32 %s487, %s488
      %s490 = smul.addr %s489, 4
      %s491 = scalar_lea.vmem %s12, %s490
      %p492 = scmp.lt.s32.totalorder %s27, 1
      %s493 = scalar_select %p492, %s27, 1
      %p494 = scmp.lt.s32.totalorder %s28, 17
      %s495 = scalar_select %p494, %s28, 17
      %s496 = smul.addr %s495, 3
      %s497 = smul.addr %s493, 54
      %s498 = sadd.s32 %s496, %s497
      %s499 = smul.addr %s498, 4
      %s500 = scalar_lea.vmem %s0, %s499
      %s501 = sadd.s32 %s28, 1
      %p502 = scmp.lt.s32.totalorder %s27, 1
      %s503 = scalar_select %p502, %s27, 1
      %p504 = scmp.lt.s32.totalorder %s501, 17
      %s505 = scalar_select %p504, %s501, 17
      %s506 = smul.addr %s505, 3
      %s507 = smul.addr %s503, 54
      %s508 = sadd.s32 %s506, %s507
      %s509 = smul.addr %s508, 4
      %s510 = scalar_lea.vmem %s1, %s509
      %s511 = sadd.s32 %s28, 1
      %s512 = sadd.s32 %s28, 2
      %p513 = scmp.lt.s32.totalorder %s27, 1
      %s514 = scalar_select %p513, %s27, 1
      %p515 = scmp.lt.s32.totalorder %s512, 17
      %s516 = scalar_select %p515, %s512, 17
      %s517 = smul.addr %s516, 3
      %s518 = smul.addr %s514, 54
      %s519 = sadd.s32 %s517, %s518
      %s520 = smul.addr %s519, 4
      %s521 = scalar_lea.vmem %s2, %s520
      %s522 = sadd.s32 %s28, 2
      %p523 = scmp.lt.s32.totalorder %s27, 1
      %s524 = scalar_select %p523, %s27, 1
      %p525 = scmp.lt.s32.totalorder %s28, 15
      %s526 = scalar_select %p525, %s28, 15
      %s527 = smul.addr %s526, 2
      %s528 = smul.addr %s524, 32
      %s529 = sadd.s32 %s527, %s528
      %s530 = smul.addr %s529, 4
      %s531 = scalar_lea.vmem %s12, %s530
      %v533 = vld [vmem:[%s3] sm:$0xf]
      %v534 = vld [vmem:[%s3 + $0x4] sm:$0xf]
      %v535 = vld [vmem:[%s3 + $0x8] sm:$0xf]
      %v536 = vld [vmem:[%s3 + $0xc] sm:$0xf]
      %v537 = vld [vmem:[%s4] sm:$0x1]
      %v538 = vld [vmem:[%s5] sm:$0x1]
      %v539 = vlaneseq
      %v540 = vshrl.u32 %v539, 7
      %v541 = vadd.s32 %v540, 8
      %v542 = vadd.s32 %v540, 16
      %p543 = scmp.eq.s32.totalorder %s28, 0
      %p544 = scmp.eq.s32.totalorder %s28, 17
      %p545 = por %p543, %p544
      %v546 = vld [vmem:[%s500] sm:$0xf]
      %v547 = vld [vmem:[%s500 + $0x4] sm:$0xf]
      %v548 = vld [vmem:[%s500 + $0x8] sm:$0x1]
      %v552 = vunpack.c.l.b16 %v546
      %v553 = vunpack.c.l.b16 %v547
      %v554 = vunpack.c.l.b16 %v548
      %v555 = vpack.c.b16 %v553, %v552
      %v556 = vpack.c.b16 %v554, %v554
      %v561 = vunpack.c.l.b16 %v533
      %v562 = vunpack.c.l.b16 %v534
      %v563 = vunpack.c.l.b16 %v535
      %v564 = vunpack.c.l.b16 %v536
      %v565 = vpack.c.b16 %v562, %v561
      %v566 = vpack.c.b16 %v564, %v563
      %vm569 = vcmask 261120
      %v571 = vsel %vm569, %v555, 0
      %v574 = vsel %vm569, %v556, 0
      %576 = vmatprep.subr.bf16.mxu0 0
      %577 = vmatpush1.bf16.msra.mxu0 %v565
      %578 = vmatprep.subr.bf16.mxu0 0
      %579 = vmatpush1.bf16.msra.mxu0 %v566
      %580 = vmatprep.subr.bf16.mxu0 0
      %581 = vmatpush1.bf16.msra.mxu0 0
      %582 = vmatprep.subr.bf16.mxu0 0
      %583 = vmatpush1.bf16.msra.mxu0 0
      %584 = vmatprep.subr.bf16.mxu0 0
      %585 = vmatpush1.bf16.msra.mxu0 0
      %586 = vmatprep.subr.bf16.mxu0 0
      %587 = vmatpush1.bf16.msra.mxu0 0
      %588 = vmatprep.subr.bf16.mxu0 0
      %589 = vmatpush1.bf16.msra.mxu0 0
      %590 = vmatprep.subr.bf16.mxu0 0
      %591 = vmatpush1.bf16.msra.mxu0 0
      %592 = vmatprep.subr.bf16.mxu0 0
      %593 = vmatpush1.bf16.msra.mxu0 0
      %594 = vmatprep.subr.bf16.mxu0 0
      %595 = vmatpush1.bf16.msra.mxu0 0
      %596 = vmatprep.subr.bf16.mxu0 0
      %597 = vmatpush1.bf16.msra.mxu0 0
      %598 = vmatprep.subr.bf16.mxu0 0
      %599 = vmatpush1.bf16.msra.mxu0 0
      %600 = vmatprep.subr.bf16.mxu0 0
      %601 = vmatpush1.bf16.msra.mxu0 0
      %602 = vmatprep.subr.bf16.mxu0 0
      %603 = vmatpush1.bf16.msra.mxu0 0
      %604 = vmatprep.subr.bf16.mxu0 0
      %605 = vmatpush1.bf16.msra.mxu0 0
      %606 = vmatprep.subr.bf16.mxu0 0
      %607 = vmatpush1.bf16.msra.mxu0 0
      %608 = vmatprep.mubr.bf16.mxu0 0
      %609 = vmatmul.mubr.bf16.gmra.mrb[0].mxu0 %v571
      %v610 = vpop.f32.mrb[0].mxu0
      %v611 = vadd.f32 0.0, %v610
      %v612 = vpop.f32.mrb[0].mxu0
      %v613 = vpop.f32.mrb[0].mxu0
      %v614 = vadd.f32 0.0, %v613
      %v615 = vpop.f32.mrb[0].mxu0
      %616 = vmatprep.mubr.bf16.mxu0 0
      %617 = vmatmul.mubr.bf16.gmra.mrb[0].mxu0 %v574
      %v618 = vpop.f32.mrb[0].mxu0
      %v619 = vadd.f32 0.0, %v618
      %v620 = vpop.f32.mrb[0].mxu0
      %v621 = vpop.f32.mrb[0].mxu0
      %v622 = vpop.f32.mrb[0].mxu0
      %623 = vdwg.mxu0
      %v625 = vlaneseq
      %v626 = vshrl.u32 %v625, 7
      %v627 = vsub.s32 0, %v626
      %v628 = vrot.slane %v537, %v627
      %v630 = vmul.f32 %v611, %v628
      %v631 = vmul.f32 %v614, %v628
      %v632 = vmul.f32 %v619, %v628
      %v634 = vlaneseq
      %v635 = vshrl.u32 %v634, 7
      %v636 = vsub.s32 0, %v635
      %v637 = vrot.slane %v538, %v636
      %v639 = vadd.f32 %v630, %v637
      %v640 = vadd.f32 %v631, %v637
      %v641 = vadd.f32 %v632, %v637
      %v642 = vmax.f32 %v639, 0.0
      %v643 = vmax.f32 %v640, 0.0
      %v644 = vmax.f32 %v641, 0.0
      %p645 = pneg %p545
      %vm646 = vcmp.ne.s32.totalorder %v540, 0
      %vm647 = vcmp.ne.s32.totalorder %v541, 0
      %vm648 = vcmp.ne.s32.totalorder %v542, 0
      %s649 = scalar_select %p645, 1, 0
      %v650 = vstv %s649
      %vm651 = vcmp.eq.s32.totalorder %v650, 1
      %vm652 = vmand %vm651, %vm646
      %vm653 = vmand %vm651, %vm647
      %vm654 = vmand %vm651, %vm648
      %vm655 = vcmp.ne.s32.totalorder %v540, 17
      %vm656 = vcmp.ne.s32.totalorder %v541, 17
      %vm657 = vcmp.ne.s32.totalorder %v542, 17
      %vm658 = vmand %vm652, %vm655
      %vm659 = vmand %vm653, %vm656
      %vm660 = vmand %vm654, %vm657
      %v661 = vsel %vm658, 1, 0
      %v662 = vsel %vm659, 1, 0
      %v663 = vsel %vm660, 1, 0
      %vm664 = vcmp.eq.s32.totalorder %v661, 1
      %vm665 = vcmp.eq.s32.totalorder %v662, 1
      %vm666 = vcmp.eq.s32.totalorder %v663, 1
      %v667 = vsel %vm664, %v642, 0.0
      %v668 = vsel %vm665, %v643, 0.0
      %v669 = vsel %vm666, %v644, 0.0
      %v670 = vpack.c.bf16 %v668, %v667
      %v671 = vpack.c.bf16 %v669, %v669
      %s672 = sadd.s32 %s28, 1
      %p673 = scmp.eq.s32.totalorder %s672, 0
      %p674 = scmp.eq.s32.totalorder %s672, 17
      %p675 = por %p673, %p674
      %v676 = vld [vmem:[%s510] sm:$0xf]
      %v677 = vld [vmem:[%s510 + $0x4] sm:$0xf]
      %v678 = vld [vmem:[%s510 + $0x8] sm:$0x1]
      %v682 = vunpack.c.l.b16 %v676
      %v683 = vunpack.c.l.b16 %v677
      %v684 = vunpack.c.l.b16 %v678
      %v685 = vpack.c.b16 %v683, %v682
      %v686 = vpack.c.b16 %v684, %v684
      %v688 = vsel %vm569, %v685, 0
      %v691 = vsel %vm569, %v686, 0
      %693 = vmatprep.subr.bf16.mxu0 0
      %694 = vmatpush1.bf16.msra.mxu0 %v565
      %695 = vmatprep.subr.bf16.mxu0 0
      %696 = vmatpush1.bf16.msra.mxu0 %v566
      %697 = vmatprep.subr.bf16.mxu0 0
      %698 = vmatpush1.bf16.msra.mxu0 0
      %699 = vmatprep.subr.bf16.mxu0 0
      %700 = vmatpush1.bf16.msra.mxu0 0
      %701 = vmatprep.subr.bf16.mxu0 0
      %702 = vmatpush1.bf16.msra.mxu0 0
      %703 = vmatprep.subr.bf16.mxu0 0
      %704 = vmatpush1.bf16.msra.mxu0 0
      %705 = vmatprep.subr.bf16.mxu0 0
      %706 = vmatpush1.bf16.msra.mxu0 0
      %707 = vmatprep.subr.bf16.mxu0 0
      %708 = vmatpush1.bf16.msra.mxu0 0
      %709 = vmatprep.subr.bf16.mxu0 0
      %710 = vmatpush1.bf16.msra.mxu0 0
      %711 = vmatprep.subr.bf16.mxu0 0
      %712 = vmatpush1.bf16.msra.mxu0 0
      %713 = vmatprep.subr.bf16.mxu0 0
      %714 = vmatpush1.bf16.msra.mxu0 0
      %715 = vmatprep.subr.bf16.mxu0 0
      %716 = vmatpush1.bf16.msra.mxu0 0
      %717 = vmatprep.subr.bf16.mxu0 0
      %718 = vmatpush1.bf16.msra.mxu0 0
      %719 = vmatprep.subr.bf16.mxu0 0
      %720 = vmatpush1.bf16.msra.mxu0 0
      %721 = vmatprep.subr.bf16.mxu0 0
      %722 = vmatpush1.bf16.msra.mxu0 0
      %723 = vmatprep.subr.bf16.mxu0 0
      %724 = vmatpush1.bf16.msra.mxu0 0
      %725 = vmatprep.mubr.bf16.mxu0 0
      %726 = vmatmul.mubr.bf16.gmra.mrb[0].mxu0 %v688
      %v727 = vpop.f32.mrb[0].mxu0
      %v728 = vadd.f32 0.0, %v727
      %v729 = vpop.f32.mrb[0].mxu0
      %v730 = vpop.f32.mrb[0].mxu0
      %v731 = vadd.f32 0.0, %v730
      %v732 = vpop.f32.mrb[0].mxu0
      %733 = vmatprep.mubr.bf16.mxu0 0
      %734 = vmatmul.mubr.bf16.gmra.mrb[0].mxu0 %v691
      %v735 = vpop.f32.mrb[0].mxu0
      %v736 = vadd.f32 0.0, %v735
      %v737 = vpop.f32.mrb[0].mxu0
      %v738 = vpop.f32.mrb[0].mxu0
      %v739 = vpop.f32.mrb[0].mxu0
      %740 = vdwg.mxu0
      %v741 = vmul.f32 %v728, %v628
      %v742 = vmul.f32 %v731, %v628
      %v743 = vmul.f32 %v736, %v628
      %v744 = vadd.f32 %v741, %v637
      %v745 = vadd.f32 %v742, %v637
      %v746 = vadd.f32 %v743, %v637
      %v747 = vmax.f32 %v744, 0.0
      %v748 = vmax.f32 %v745, 0.0
      %v749 = vmax.f32 %v746, 0.0
      %p750 = pneg %p675
      %s751 = scalar_select %p750, 1, 0
      %v752 = vstv %s751
      %vm753 = vcmp.eq.s32.totalorder %v752, 1
      %vm754 = vmand %vm753, %vm646
      %vm755 = vmand %vm753, %vm647
      %vm756 = vmand %vm753, %vm648
      %vm757 = vmand %vm754, %vm655
      %vm758 = vmand %vm755, %vm656
      %vm759 = vmand %vm756, %vm657
      %v760 = vsel %vm757, 1, 0
      %v761 = vsel %vm758, 1, 0
      %v762 = vsel %vm759, 1, 0
      %vm763 = vcmp.eq.s32.totalorder %v760, 1
      %vm764 = vcmp.eq.s32.totalorder %v761, 1
      %vm765 = vcmp.eq.s32.totalorder %v762, 1
      %v766 = vsel %vm763, %v747, 0.0
      %v767 = vsel %vm764, %v748, 0.0
      %v768 = vsel %vm765, %v749, 0.0
      %v769 = vpack.c.bf16 %v767, %v766
      %v770 = vpack.c.bf16 %v768, %v768
      %s771 = sadd.s32 %s28, 2
      %p772 = scmp.eq.s32.totalorder %s771, 0
      %p773 = scmp.eq.s32.totalorder %s771, 17
      %p774 = por %p772, %p773
      %v775 = vld [vmem:[%s521] sm:$0xf]
      %v776 = vld [vmem:[%s521 + $0x4] sm:$0xf]
      %v777 = vld [vmem:[%s521 + $0x8] sm:$0x1]
      %v781 = vunpack.c.l.b16 %v775
      %v782 = vunpack.c.l.b16 %v776
      %v783 = vunpack.c.l.b16 %v777
      %v784 = vpack.c.b16 %v782, %v781
      %v785 = vpack.c.b16 %v783, %v783
      %v787 = vsel %vm569, %v784, 0
      %v790 = vsel %vm569, %v785, 0
      %792 = vmatprep.subr.bf16.mxu0 0
      %793 = vmatpush1.bf16.msra.mxu0 %v565
      %794 = vmatprep.subr.bf16.mxu0 0
      %795 = vmatpush1.bf16.msra.mxu0 %v566
      %796 = vmatprep.subr.bf16.mxu0 0
      %797 = vmatpush1.bf16.msra.mxu0 0
      %798 = vmatprep.subr.bf16.mxu0 0
      %799 = vmatpush1.bf16.msra.mxu0 0
      %800 = vmatprep.subr.bf16.mxu0 0
      %801 = vmatpush1.bf16.msra.mxu0 0
      %802 = vmatprep.subr.bf16.mxu0 0
      %803 = vmatpush1.bf16.msra.mxu0 0
      %804 = vmatprep.subr.bf16.mxu0 0
      %805 = vmatpush1.bf16.msra.mxu0 0
      %806 = vmatprep.subr.bf16.mxu0 0
      %807 = vmatpush1.bf16.msra.mxu0 0
      %808 = vmatprep.subr.bf16.mxu0 0
      %809 = vmatpush1.bf16.msra.mxu0 0
      %810 = vmatprep.subr.bf16.mxu0 0
      %811 = vmatpush1.bf16.msra.mxu0 0
      %812 = vmatprep.subr.bf16.mxu0 0
      %813 = vmatpush1.bf16.msra.mxu0 0
      %814 = vmatprep.subr.bf16.mxu0 0
      %815 = vmatpush1.bf16.msra.mxu0 0
      %816 = vmatprep.subr.bf16.mxu0 0
      %817 = vmatpush1.bf16.msra.mxu0 0
      %818 = vmatprep.subr.bf16.mxu0 0
      %819 = vmatpush1.bf16.msra.mxu0 0
      %820 = vmatprep.subr.bf16.mxu0 0
      %821 = vmatpush1.bf16.msra.mxu0 0
      %822 = vmatprep.subr.bf16.mxu0 0
      %823 = vmatpush1.bf16.msra.mxu0 0
      %824 = vmatprep.mubr.bf16.mxu0 0
      %825 = vmatmul.mubr.bf16.gmra.mrb[0].mxu0 %v787
      %v826 = vpop.f32.mrb[0].mxu0
      %v827 = vadd.f32 0.0, %v826
      %v828 = vpop.f32.mrb[0].mxu0
      %v829 = vpop.f32.mrb[0].mxu0
      %v830 = vadd.f32 0.0, %v829
      %v831 = vpop.f32.mrb[0].mxu0
      %832 = vmatprep.mubr.bf16.mxu0 0
      %833 = vmatmul.mubr.bf16.gmra.mrb[0].mxu0 %v790
      %v834 = vpop.f32.mrb[0].mxu0
      %v835 = vadd.f32 0.0, %v834
      %v836 = vpop.f32.mrb[0].mxu0
      %v837 = vpop.f32.mrb[0].mxu0
      %v838 = vpop.f32.mrb[0].mxu0
      %839 = vdwg.mxu0
      %v840 = vmul.f32 %v827, %v628
      %v841 = vmul.f32 %v830, %v628
      %v842 = vmul.f32 %v835, %v628
      %v843 = vadd.f32 %v840, %v637
      %v844 = vadd.f32 %v841, %v637
      %v845 = vadd.f32 %v842, %v637
      %v846 = vmax.f32 %v843, 0.0
      %v847 = vmax.f32 %v844, 0.0
      %v848 = vmax.f32 %v845, 0.0
      %p849 = pneg %p774
      %s850 = scalar_select %p849, 1, 0
      %v851 = vstv %s850
      %vm852 = vcmp.eq.s32.totalorder %v851, 1
      %vm853 = vmand %vm852, %vm646
      %vm854 = vmand %vm852, %vm647
      %vm855 = vmand %vm852, %vm648
      %vm856 = vmand %vm853, %vm655
      %vm857 = vmand %vm854, %vm656
      %vm858 = vmand %vm855, %vm657
      %v859 = vsel %vm856, 1, 0
      %v860 = vsel %vm857, 1, 0
      %v861 = vsel %vm858, 1, 0
      %vm862 = vcmp.eq.s32.totalorder %v859, 1
      %vm863 = vcmp.eq.s32.totalorder %v860, 1
      %vm864 = vcmp.eq.s32.totalorder %v861, 1
      %v865 = vsel %vm862, %v846, 0.0
      %v866 = vsel %vm863, %v847, 0.0
      %v867 = vsel %vm864, %v848, 0.0
      %v868 = vpack.c.bf16 %v866, %v865
      %v869 = vpack.c.bf16 %v867, %v867
      %v870 = vld [vmem:[%s6] sm:$0xf]
      %s871 = scalar_lea.vmem %s6, 4
      %v872 = vld [vmem:[%s871] sm:$0xf]
      %vm873 = vsmask.f32 7424
      %v875 = vshrl.u32 %v670, 16
      %v877 = vshll.u32 %v670, 16
      %v879 = vrot.slane %v877, 1
      %v880 = vor.u32 %v875, %v879
      %v882 = vshll.u32 %v671, 16
      %v884 = vrot.slane %v882, 1
      %v885 = vsel %vm873, %v880, %v884
      %vm886 = vcmask 64512
      %v888 = vsel %vm886, %v885, 0
      %vm890 = vcmask 1043456
      %v892 = vsel %vm890, %v872, 0
      %894 = vmatprep.subr.bf16.mxu0 0
      %895 = vmatpush1.bf16.msra.mxu0 %v892
      %896 = vmatprep.subr.bf16.mxu0 0
      %897 = vmatpush1.bf16.msra.mxu0 0
      %898 = vmatprep.subr.bf16.mxu0 0
      %899 = vmatpush1.bf16.msra.mxu0 0
      %900 = vmatprep.subr.bf16.mxu0 0
      %901 = vmatpush1.bf16.msra.mxu0 0
      %902 = vmatprep.subr.bf16.mxu0 0
      %903 = vmatpush1.bf16.msra.mxu0 0
      %904 = vmatprep.subr.bf16.mxu0 0
      %905 = vmatpush1.bf16.msra.mxu0 0
      %906 = vmatprep.subr.bf16.mxu0 0
      %907 = vmatpush1.bf16.msra.mxu0 0
      %908 = vmatprep.subr.bf16.mxu0 0
      %909 = vmatpush1.bf16.msra.mxu0 0
      %910 = vmatprep.subr.bf16.mxu0 0
      %911 = vmatpush1.bf16.msra.mxu0 0
      %912 = vmatprep.subr.bf16.mxu0 0
      %913 = vmatpush1.bf16.msra.mxu0 0
      %914 = vmatprep.subr.bf16.mxu0 0
      %915 = vmatpush1.bf16.msra.mxu0 0
      %916 = vmatprep.subr.bf16.mxu0 0
      %917 = vmatpush1.bf16.msra.mxu0 0
      %918 = vmatprep.subr.bf16.mxu0 0
      %919 = vmatpush1.bf16.msra.mxu0 0
      %920 = vmatprep.subr.bf16.mxu0 0
      %921 = vmatpush1.bf16.msra.mxu0 0
      %922 = vmatprep.subr.bf16.mxu0 0
      %923 = vmatpush1.bf16.msra.mxu0 0
      %924 = vmatprep.subr.bf16.mxu0 0
      %925 = vmatpush1.bf16.msra.mxu0 0
      %926 = vmatprep.mubr.bf16.mxu0 0
      %927 = vmatmul.mubr.bf16.gmra.mrb[0].mxu0 %v888
      %v928 = vpop.f32.mrb[0].mxu0
      %v929 = vadd.f32 0.0, %v928
      %v930 = vpop.f32.mrb[0].mxu0
      %v931 = vpop.f32.mrb[0].mxu0
      %v932 = vadd.f32 0.0, %v931
      %v933 = vpop.f32.mrb[0].mxu0
      %934 = vdwg.mxu0
      %v935 = vsel %vm886, %v670, 0
      %v938 = vsel %vm890, %v870, 0
      %940 = vmatprep.subr.bf16.mxu0 0
      %941 = vmatpush1.bf16.msra.mxu0 %v938
      %942 = vmatprep.subr.bf16.mxu0 0
      %943 = vmatpush1.bf16.msra.mxu0 0
      %944 = vmatprep.subr.bf16.mxu0 0
      %945 = vmatpush1.bf16.msra.mxu0 0
      %946 = vmatprep.subr.bf16.mxu0 0
      %947 = vmatpush1.bf16.msra.mxu0 0
      %948 = vmatprep.subr.bf16.mxu0 0
      %949 = vmatpush1.bf16.msra.mxu0 0
      %950 = vmatprep.subr.bf16.mxu0 0
      %951 = vmatpush1.bf16.msra.mxu0 0
      %952 = vmatprep.subr.bf16.mxu0 0
      %953 = vmatpush1.bf16.msra.mxu0 0
      %954 = vmatprep.subr.bf16.mxu0 0
      %955 = vmatpush1.bf16.msra.mxu0 0
      %956 = vmatprep.subr.bf16.mxu0 0
      %957 = vmatpush1.bf16.msra.mxu0 0
      %958 = vmatprep.subr.bf16.mxu0 0
      %959 = vmatpush1.bf16.msra.mxu0 0
      %960 = vmatprep.subr.bf16.mxu0 0
      %961 = vmatpush1.bf16.msra.mxu0 0
      %962 = vmatprep.subr.bf16.mxu0 0
      %963 = vmatpush1.bf16.msra.mxu0 0
      %964 = vmatprep.subr.bf16.mxu0 0
      %965 = vmatpush1.bf16.msra.mxu0 0
      %966 = vmatprep.subr.bf16.mxu0 0
      %967 = vmatpush1.bf16.msra.mxu0 0
      %968 = vmatprep.subr.bf16.mxu0 0
      %969 = vmatpush1.bf16.msra.mxu0 0
      %970 = vmatprep.subr.bf16.mxu0 0
      %971 = vmatpush1.bf16.msra.mxu0 0
      %972 = vmatprep.mubr.bf16.mxu0 0
      %973 = vmatmul.mubr.bf16.gmra.mrb[0].mxu0 %v935
      %v974 = vpop.f32.mrb[0].mxu0
      %v975 = vadd.f32 %v929, %v974
      %v976 = vpop.f32.mrb[0].mxu0
      %v977 = vpop.f32.mrb[0].mxu0
      %v978 = vadd.f32 %v932, %v977
      %v979 = vpop.f32.mrb[0].mxu0
      %980 = vdwg.mxu0
      %s981 = scalar_lea.vmem %s6, 8
      %v982 = vld [vmem:[%s981] sm:$0xf]
      %vm985 = vcmask 1046528
      %v986 = vrot.slane %v670, 1
      %v987 = vrot.slane %v671, 1
      %v988 = vsel %vm985, %v986, %v987
      %v990 = vsel %vm886, %v988, 0
      %v993 = vsel %vm890, %v982, 0
      %995 = vmatprep.subr.bf16.mxu0 0
      %996 = vmatpush1.bf16.msra.mxu0 %v993
      %997 = vmatprep.subr.bf16.mxu0 0
      %998 = vmatpush1.bf16.msra.mxu0 0
      %999 = vmatprep.subr.bf16.mxu0 0
      %1000 = vmatpush1.bf16.msra.mxu0 0
      %1001 = vmatprep.subr.bf16.mxu0 0
      %1002 = vmatpush1.bf16.msra.mxu0 0
      %1003 = vmatprep.subr.bf16.mxu0 0
      %1004 = vmatpush1.bf16.msra.mxu0 0
      %1005 = vmatprep.subr.bf16.mxu0 0
      %1006 = vmatpush1.bf16.msra.mxu0 0
      %1007 = vmatprep.subr.bf16.mxu0 0
      %1008 = vmatpush1.bf16.msra.mxu0 0
      %1009 = vmatprep.subr.bf16.mxu0 0
      %1010 = vmatpush1.bf16.msra.mxu0 0
      %1011 = vmatprep.subr.bf16.mxu0 0
      %1012 = vmatpush1.bf16.msra.mxu0 0
      %1013 = vmatprep.subr.bf16.mxu0 0
      %1014 = vmatpush1.bf16.msra.mxu0 0
      %1015 = vmatprep.subr.bf16.mxu0 0
      %1016 = vmatpush1.bf16.msra.mxu0 0
      %1017 = vmatprep.subr.bf16.mxu0 0
      %1018 = vmatpush1.bf16.msra.mxu0 0
      %1019 = vmatprep.subr.bf16.mxu0 0
      %1020 = vmatpush1.bf16.msra.mxu0 0
      %1021 = vmatprep.subr.bf16.mxu0 0
      %1022 = vmatpush1.bf16.msra.mxu0 0
      %1023 = vmatprep.subr.bf16.mxu0 0
      %1024 = vmatpush1.bf16.msra.mxu0 0
      %1025 = vmatprep.subr.bf16.mxu0 0
      %1026 = vmatpush1.bf16.msra.mxu0 0
      %1027 = vmatprep.mubr.bf16.mxu0 0
      %1028 = vmatmul.mubr.bf16.gmra.mrb[0].mxu0 %v990
      %v1029 = vpop.f32.mrb[0].mxu0
      %v1030 = vadd.f32 0.0, %v1029
      %v1031 = vpop.f32.mrb[0].mxu0
      %v1032 = vpop.f32.mrb[0].mxu0
      %v1033 = vadd.f32 0.0, %v1032
      %v1034 = vpop.f32.mrb[0].mxu0
      %1035 = vdwg.mxu0
      %v1036 = vadd.f32 %v975, %v1030
      %v1037 = vadd.f32 %v978, %v1033
      %s1038 = scalar_lea.vmem %s6, 12
      %v1039 = vld [vmem:[%s1038] sm:$0xf]
      %v1041 = vsel %vm886, %v769, 0
      %v1044 = vsel %vm890, %v1039, 0
      %1046 = vmatprep.subr.bf16.mxu0 0
      %1047 = vmatpush1.bf16.msra.mxu0 %v1044
      %1048 = vmatprep.subr.bf16.mxu0 0
      %1049 = vmatpush1.bf16.msra.mxu0 0
      %1050 = vmatprep.subr.bf16.mxu0 0
      %1051 = vmatpush1.bf16.msra.mxu0 0
      %1052 = vmatprep.subr.bf16.mxu0 0
      %1053 = vmatpush1.bf16.msra.mxu0 0
      %1054 = vmatprep.subr.bf16.mxu0 0
      %1055 = vmatpush1.bf16.msra.mxu0 0
      %1056 = vmatprep.subr.bf16.mxu0 0
      %1057 = vmatpush1.bf16.msra.mxu0 0
      %1058 = vmatprep.subr.bf16.mxu0 0
      %1059 = vmatpush1.bf16.msra.mxu0 0
      %1060 = vmatprep.subr.bf16.mxu0 0
      %1061 = vmatpush1.bf16.msra.mxu0 0
      %1062 = vmatprep.subr.bf16.mxu0 0
      %1063 = vmatpush1.bf16.msra.mxu0 0
      %1064 = vmatprep.subr.bf16.mxu0 0
      %1065 = vmatpush1.bf16.msra.mxu0 0
      %1066 = vmatprep.subr.bf16.mxu0 0
      %1067 = vmatpush1.bf16.msra.mxu0 0
      %1068 = vmatprep.subr.bf16.mxu0 0
      %1069 = vmatpush1.bf16.msra.mxu0 0
      %1070 = vmatprep.subr.bf16.mxu0 0
      %1071 = vmatpush1.bf16.msra.mxu0 0
      %1072 = vmatprep.subr.bf16.mxu0 0
      %1073 = vmatpush1.bf16.msra.mxu0 0
      %1074 = vmatprep.subr.bf16.mxu0 0
      %1075 = vmatpush1.bf16.msra.mxu0 0
      %1076 = vmatprep.subr.bf16.mxu0 0
      %1077 = vmatpush1.bf16.msra.mxu0 0
      %1078 = vmatprep.mubr.bf16.mxu0 0
      %1079 = vmatmul.mubr.bf16.gmra.mrb[0].mxu0 %v1041
      %v1080 = vpop.f32.mrb[0].mxu0
      %v1081 = vadd.f32 0.0, %v1080
      %v1082 = vpop.f32.mrb[0].mxu0
      %v1083 = vpop.f32.mrb[0].mxu0
      %v1084 = vadd.f32 0.0, %v1083
      %v1085 = vpop.f32.mrb[0].mxu0
      %1086 = vdwg.mxu0
      %v1087 = vadd.f32 %v1036, %v1081
      %v1088 = vadd.f32 %v1037, %v1084
      %s1089 = scalar_lea.vmem %s6, 16
      %v1090 = vld [vmem:[%s1089] sm:$0xf]
      %v1091 = vshrl.u32 %v769, 16
      %v1093 = vshll.u32 %v769, 16
      %v1095 = vrot.slane %v1093, 1
      %v1096 = vor.u32 %v1091, %v1095
      %v1098 = vshll.u32 %v770, 16
      %v1100 = vrot.slane %v1098, 1
      %v1101 = vsel %vm873, %v1096, %v1100
      %v1103 = vsel %vm886, %v1101, 0
      %v1106 = vsel %vm890, %v1090, 0
      %1108 = vmatprep.subr.bf16.mxu0 0
      %1109 = vmatpush1.bf16.msra.mxu0 %v1106
      %1110 = vmatprep.subr.bf16.mxu0 0
      %1111 = vmatpush1.bf16.msra.mxu0 0
      %1112 = vmatprep.subr.bf16.mxu0 0
      %1113 = vmatpush1.bf16.msra.mxu0 0
      %1114 = vmatprep.subr.bf16.mxu0 0
      %1115 = vmatpush1.bf16.msra.mxu0 0
      %1116 = vmatprep.subr.bf16.mxu0 0
      %1117 = vmatpush1.bf16.msra.mxu0 0
      %1118 = vmatprep.subr.bf16.mxu0 0
      %1119 = vmatpush1.bf16.msra.mxu0 0
      %1120 = vmatprep.subr.bf16.mxu0 0
      %1121 = vmatpush1.bf16.msra.mxu0 0
      %1122 = vmatprep.subr.bf16.mxu0 0
      %1123 = vmatpush1.bf16.msra.mxu0 0
      %1124 = vmatprep.subr.bf16.mxu0 0
      %1125 = vmatpush1.bf16.msra.mxu0 0
      %1126 = vmatprep.subr.bf16.mxu0 0
      %1127 = vmatpush1.bf16.msra.mxu0 0
      %1128 = vmatprep.subr.bf16.mxu0 0
      %1129 = vmatpush1.bf16.msra.mxu0 0
      %1130 = vmatprep.subr.bf16.mxu0 0
      %1131 = vmatpush1.bf16.msra.mxu0 0
      %1132 = vmatprep.subr.bf16.mxu0 0
      %1133 = vmatpush1.bf16.msra.mxu0 0
      %1134 = vmatprep.subr.bf16.mxu0 0
      %1135 = vmatpush1.bf16.msra.mxu0 0
      %1136 = vmatprep.subr.bf16.mxu0 0
      %1137 = vmatpush1.bf16.msra.mxu0 0
      %1138 = vmatprep.subr.bf16.mxu0 0
      %1139 = vmatpush1.bf16.msra.mxu0 0
      %1140 = vmatprep.mubr.bf16.mxu0 0
      %1141 = vmatmul.mubr.bf16.gmra.mrb[0].mxu0 %v1103
      %v1142 = vpop.f32.mrb[0].mxu0
      %v1143 = vadd.f32 0.0, %v1142
      %v1144 = vpop.f32.mrb[0].mxu0
      %v1145 = vpop.f32.mrb[0].mxu0
      %v1146 = vadd.f32 0.0, %v1145
      %v1147 = vpop.f32.mrb[0].mxu0
      %1148 = vdwg.mxu0
      %v1149 = vadd.f32 %v1087, %v1143
      %v1150 = vadd.f32 %v1088, %v1146
      %s1151 = scalar_lea.vmem %s6, 20
      %v1152 = vld [vmem:[%s1151] sm:$0xf]
      %v1155 = vrot.slane %v769, 1
      %v1156 = vrot.slane %v770, 1
      %v1157 = vsel %vm985, %v1155, %v1156
      %v1159 = vsel %vm886, %v1157, 0
      %v1162 = vsel %vm890, %v1152, 0
      %1164 = vmatprep.subr.bf16.mxu0 0
      %1165 = vmatpush1.bf16.msra.mxu0 %v1162
      %1166 = vmatprep.subr.bf16.mxu0 0
      %1167 = vmatpush1.bf16.msra.mxu0 0
      %1168 = vmatprep.subr.bf16.mxu0 0
      %1169 = vmatpush1.bf16.msra.mxu0 0
      %1170 = vmatprep.subr.bf16.mxu0 0
      %1171 = vmatpush1.bf16.msra.mxu0 0
      %1172 = vmatprep.subr.bf16.mxu0 0
      %1173 = vmatpush1.bf16.msra.mxu0 0
      %1174 = vmatprep.subr.bf16.mxu0 0
      %1175 = vmatpush1.bf16.msra.mxu0 0
      %1176 = vmatprep.subr.bf16.mxu0 0
      %1177 = vmatpush1.bf16.msra.mxu0 0
      %1178 = vmatprep.subr.bf16.mxu0 0
      %1179 = vmatpush1.bf16.msra.mxu0 0
      %1180 = vmatprep.subr.bf16.mxu0 0
      %1181 = vmatpush1.bf16.msra.mxu0 0
      %1182 = vmatprep.subr.bf16.mxu0 0
      %1183 = vmatpush1.bf16.msra.mxu0 0
      %1184 = vmatprep.subr.bf16.mxu0 0
      %1185 = vmatpush1.bf16.msra.mxu0 0
      %1186 = vmatprep.subr.bf16.mxu0 0
      %1187 = vmatpush1.bf16.msra.mxu0 0
      %1188 = vmatprep.subr.bf16.mxu0 0
      %1189 = vmatpush1.bf16.msra.mxu0 0
      %1190 = vmatprep.subr.bf16.mxu0 0
      %1191 = vmatpush1.bf16.msra.mxu0 0
      %1192 = vmatprep.subr.bf16.mxu0 0
      %1193 = vmatpush1.bf16.msra.mxu0 0
      %1194 = vmatprep.subr.bf16.mxu0 0
      %1195 = vmatpush1.bf16.msra.mxu0 0
      %1196 = vmatprep.mubr.bf16.mxu0 0
      %1197 = vmatmul.mubr.bf16.gmra.mrb[0].mxu0 %v1159
      %v1198 = vpop.f32.mrb[0].mxu0
      %v1199 = vadd.f32 0.0, %v1198
      %v1200 = vpop.f32.mrb[0].mxu0
      %v1201 = vpop.f32.mrb[0].mxu0
      %v1202 = vadd.f32 0.0, %v1201
      %v1203 = vpop.f32.mrb[0].mxu0
      %1204 = vdwg.mxu0
      %v1205 = vadd.f32 %v1149, %v1199
      %v1206 = vadd.f32 %v1150, %v1202
      %s1207 = scalar_lea.vmem %s6, 24
      %v1208 = vld [vmem:[%s1207] sm:$0xf]
      %v1210 = vsel %vm886, %v868, 0
      %v1213 = vsel %vm890, %v1208, 0
      %1215 = vmatprep.subr.bf16.mxu0 0
      %1216 = vmatpush1.bf16.msra.mxu0 %v1213
      %1217 = vmatprep.subr.bf16.mxu0 0
      %1218 = vmatpush1.bf16.msra.mxu0 0
      %1219 = vmatprep.subr.bf16.mxu0 0
      %1220 = vmatpush1.bf16.msra.mxu0 0
      %1221 = vmatprep.subr.bf16.mxu0 0
      %1222 = vmatpush1.bf16.msra.mxu0 0
      %1223 = vmatprep.subr.bf16.mxu0 0
      %1224 = vmatpush1.bf16.msra.mxu0 0
      %1225 = vmatprep.subr.bf16.mxu0 0
      %1226 = vmatpush1.bf16.msra.mxu0 0
      %1227 = vmatprep.subr.bf16.mxu0 0
      %1228 = vmatpush1.bf16.msra.mxu0 0
      %1229 = vmatprep.subr.bf16.mxu0 0
      %1230 = vmatpush1.bf16.msra.mxu0 0
      %1231 = vmatprep.subr.bf16.mxu0 0
      %1232 = vmatpush1.bf16.msra.mxu0 0
      %1233 = vmatprep.subr.bf16.mxu0 0
      %1234 = vmatpush1.bf16.msra.mxu0 0
      %1235 = vmatprep.subr.bf16.mxu0 0
      %1236 = vmatpush1.bf16.msra.mxu0 0
      %1237 = vmatprep.subr.bf16.mxu0 0
      %1238 = vmatpush1.bf16.msra.mxu0 0
      %1239 = vmatprep.subr.bf16.mxu0 0
      %1240 = vmatpush1.bf16.msra.mxu0 0
      %1241 = vmatprep.subr.bf16.mxu0 0
      %1242 = vmatpush1.bf16.msra.mxu0 0
      %1243 = vmatprep.subr.bf16.mxu0 0
      %1244 = vmatpush1.bf16.msra.mxu0 0
      %1245 = vmatprep.subr.bf16.mxu0 0
      %1246 = vmatpush1.bf16.msra.mxu0 0
      %1247 = vmatprep.mubr.bf16.mxu0 0
      %1248 = vmatmul.mubr.bf16.gmra.mrb[0].mxu0 %v1210
      %v1249 = vpop.f32.mrb[0].mxu0
      %v1250 = vadd.f32 0.0, %v1249
      %v1251 = vpop.f32.mrb[0].mxu0
      %v1252 = vpop.f32.mrb[0].mxu0
      %v1253 = vadd.f32 0.0, %v1252
      %v1254 = vpop.f32.mrb[0].mxu0
      %1255 = vdwg.mxu0
      %v1256 = vadd.f32 %v1205, %v1250
      %v1257 = vadd.f32 %v1206, %v1253
      %s1258 = scalar_lea.vmem %s6, 28
      %v1259 = vld [vmem:[%s1258] sm:$0xf]
      %v1260 = vshrl.u32 %v868, 16
      %v1262 = vshll.u32 %v868, 16
      %v1264 = vrot.slane %v1262, 1
      %v1265 = vor.u32 %v1260, %v1264
      %v1267 = vshll.u32 %v869, 16
      %v1269 = vrot.slane %v1267, 1
      %v1270 = vsel %vm873, %v1265, %v1269
      %v1272 = vsel %vm886, %v1270, 0
      %v1275 = vsel %vm890, %v1259, 0
      %1277 = vmatprep.subr.bf16.mxu0 0
      %1278 = vmatpush1.bf16.msra.mxu0 %v1275
      %1279 = vmatprep.subr.bf16.mxu0 0
      %1280 = vmatpush1.bf16.msra.mxu0 0
      %1281 = vmatprep.subr.bf16.mxu0 0
      %1282 = vmatpush1.bf16.msra.mxu0 0
      %1283 = vmatprep.subr.bf16.mxu0 0
      %1284 = vmatpush1.bf16.msra.mxu0 0
      %1285 = vmatprep.subr.bf16.mxu0 0
      %1286 = vmatpush1.bf16.msra.mxu0 0
      %1287 = vmatprep.subr.bf16.mxu0 0
      %1288 = vmatpush1.bf16.msra.mxu0 0
      %1289 = vmatprep.subr.bf16.mxu0 0
      %1290 = vmatpush1.bf16.msra.mxu0 0
      %1291 = vmatprep.subr.bf16.mxu0 0
      %1292 = vmatpush1.bf16.msra.mxu0 0
      %1293 = vmatprep.subr.bf16.mxu0 0
      %1294 = vmatpush1.bf16.msra.mxu0 0
      %1295 = vmatprep.subr.bf16.mxu0 0
      %1296 = vmatpush1.bf16.msra.mxu0 0
      %1297 = vmatprep.subr.bf16.mxu0 0
      %1298 = vmatpush1.bf16.msra.mxu0 0
      %1299 = vmatprep.subr.bf16.mxu0 0
      %1300 = vmatpush1.bf16.msra.mxu0 0
      %1301 = vmatprep.subr.bf16.mxu0 0
      %1302 = vmatpush1.bf16.msra.mxu0 0
      %1303 = vmatprep.subr.bf16.mxu0 0
      %1304 = vmatpush1.bf16.msra.mxu0 0
      %1305 = vmatprep.subr.bf16.mxu0 0
      %1306 = vmatpush1.bf16.msra.mxu0 0
      %1307 = vmatprep.subr.bf16.mxu0 0
      %1308 = vmatpush1.bf16.msra.mxu0 0
      %1309 = vmatprep.mubr.bf16.mxu0 0
      %1310 = vmatmul.mubr.bf16.gmra.mrb[0].mxu0 %v1272
      %v1311 = vpop.f32.mrb[0].mxu0
      %v1312 = vadd.f32 0.0, %v1311
      %v1313 = vpop.f32.mrb[0].mxu0
      %v1314 = vpop.f32.mrb[0].mxu0
      %v1315 = vadd.f32 0.0, %v1314
      %v1316 = vpop.f32.mrb[0].mxu0
      %1317 = vdwg.mxu0
      %v1318 = vadd.f32 %v1256, %v1312
      %v1319 = vadd.f32 %v1257, %v1315
      %s1320 = scalar_lea.vmem %s6, 32
      %v1321 = vld [vmem:[%s1320] sm:$0xf]
      %v1324 = vrot.slane %v868, 1
      %v1325 = vrot.slane %v869, 1
      %v1326 = vsel %vm985, %v1324, %v1325
      %v1328 = vsel %vm886, %v1326, 0
      %v1331 = vsel %vm890, %v1321, 0
      %1333 = vmatprep.subr.bf16.mxu0 0
      %1334 = vmatpush1.bf16.msra.mxu0 %v1331
      %1335 = vmatprep.subr.bf16.mxu0 0
      %1336 = vmatpush1.bf16.msra.mxu0 0
      %1337 = vmatprep.subr.bf16.mxu0 0
      %1338 = vmatpush1.bf16.msra.mxu0 0
      %1339 = vmatprep.subr.bf16.mxu0 0
      %1340 = vmatpush1.bf16.msra.mxu0 0
      %1341 = vmatprep.subr.bf16.mxu0 0
      %1342 = vmatpush1.bf16.msra.mxu0 0
      %1343 = vmatprep.subr.bf16.mxu0 0
      %1344 = vmatpush1.bf16.msra.mxu0 0
      %1345 = vmatprep.subr.bf16.mxu0 0
      %1346 = vmatpush1.bf16.msra.mxu0 0
      %1347 = vmatprep.subr.bf16.mxu0 0
      %1348 = vmatpush1.bf16.msra.mxu0 0
      %1349 = vmatprep.subr.bf16.mxu0 0
      %1350 = vmatpush1.bf16.msra.mxu0 0
      %1351 = vmatprep.subr.bf16.mxu0 0
      %1352 = vmatpush1.bf16.msra.mxu0 0
      %1353 = vmatprep.subr.bf16.mxu0 0
      %1354 = vmatpush1.bf16.msra.mxu0 0
      %1355 = vmatprep.subr.bf16.mxu0 0
      %1356 = vmatpush1.bf16.msra.mxu0 0
      %1357 = vmatprep.subr.bf16.mxu0 0
      %1358 = vmatpush1.bf16.msra.mxu0 0
      %1359 = vmatprep.subr.bf16.mxu0 0
      %1360 = vmatpush1.bf16.msra.mxu0 0
      %1361 = vmatprep.subr.bf16.mxu0 0
      %1362 = vmatpush1.bf16.msra.mxu0 0
      %1363 = vmatprep.subr.bf16.mxu0 0
      %1364 = vmatpush1.bf16.msra.mxu0 0
      %1365 = vmatprep.mubr.bf16.mxu0 0
      %1366 = vmatmul.mubr.bf16.gmra.mrb[0].mxu0 %v1328
      %v1367 = vpop.f32.mrb[0].mxu0
      %v1368 = vadd.f32 0.0, %v1367
      %v1369 = vpop.f32.mrb[0].mxu0
      %v1370 = vpop.f32.mrb[0].mxu0
      %v1371 = vadd.f32 0.0, %v1370
      %v1372 = vpop.f32.mrb[0].mxu0
      %1373 = vdwg.mxu0
      %v1374 = vadd.f32 %v1318, %v1368
      %v1375 = vadd.f32 %v1319, %v1371
      %v1376 = vld [vmem:[%s7] sm:$0x1]
      %v1378 = vlaneseq
      %v1379 = vshrl.u32 %v1378, 7
      %v1380 = vsub.s32 0, %v1379
      %v1381 = vrot.slane %v1376, %v1380
      %v1383 = vmul.f32 %v1374, %v1381
      %v1384 = vmul.f32 %v1375, %v1381
      %v1385 = vld [vmem:[%s8] sm:$0x1]
      %v1387 = vlaneseq
      %v1388 = vshrl.u32 %v1387, 7
      %v1389 = vsub.s32 0, %v1388
      %v1390 = vrot.slane %v1385, %v1389
      %v1392 = vadd.f32 %v1383, %v1390
      %v1393 = vadd.f32 %v1384, %v1390
      %v1394 = vmax.f32 %v1392, 0.0
      %v1395 = vmax.f32 %v1393, 0.0
      %v1396 = vpack.c.bf16 %v1395, %v1394
      %v1397 = vld [vmem:[%s9] sm:$0xf]
      %v1399 = vsel %vm886, %v1396, 0
      %v1402 = vsel %vm890, %v1397, 0
      %1404 = vmatprep.subr.bf16.mxu0 0
      %1405 = vmatpush1.bf16.msra.mxu0 %v1402
      %1406 = vmatprep.subr.bf16.mxu0 0
      %1407 = vmatpush1.bf16.msra.mxu0 0
      %1408 = vmatprep.subr.bf16.mxu0 0
      %1409 = vmatpush1.bf16.msra.mxu0 0
      %1410 = vmatprep.subr.bf16.mxu0 0
      %1411 = vmatpush1.bf16.msra.mxu0 0
      %1412 = vmatprep.subr.bf16.mxu0 0
      %1413 = vmatpush1.bf16.msra.mxu0 0
      %1414 = vmatprep.subr.bf16.mxu0 0
      %1415 = vmatpush1.bf16.msra.mxu0 0
      %1416 = vmatprep.subr.bf16.mxu0 0
      %1417 = vmatpush1.bf16.msra.mxu0 0
      %1418 = vmatprep.subr.bf16.mxu0 0
      %1419 = vmatpush1.bf16.msra.mxu0 0
      %1420 = vmatprep.subr.bf16.mxu0 0
      %1421 = vmatpush1.bf16.msra.mxu0 0
      %1422 = vmatprep.subr.bf16.mxu0 0
      %1423 = vmatpush1.bf16.msra.mxu0 0
      %1424 = vmatprep.subr.bf16.mxu0 0
      %1425 = vmatpush1.bf16.msra.mxu0 0
      %1426 = vmatprep.subr.bf16.mxu0 0
      %1427 = vmatpush1.bf16.msra.mxu0 0
      %1428 = vmatprep.subr.bf16.mxu0 0
      %1429 = vmatpush1.bf16.msra.mxu0 0
      %1430 = vmatprep.subr.bf16.mxu0 0
      %1431 = vmatpush1.bf16.msra.mxu0 0
      %1432 = vmatprep.subr.bf16.mxu0 0
      %1433 = vmatpush1.bf16.msra.mxu0 0
      %1434 = vmatprep.subr.bf16.mxu0 0
      %1435 = vmatpush1.bf16.msra.mxu0 0
      %1436 = vmatprep.mubr.bf16.mxu0 0
      %1437 = vmatmul.mubr.bf16.gmra.mrb[0].mxu0 %v1399
      %v1438 = vpop.f32.mrb[0].mxu0
      %v1439 = vadd.f32 0.0, %v1438
      %v1440 = vpop.f32.mrb[0].mxu0
      %v1441 = vpop.f32.mrb[0].mxu0
      %v1442 = vadd.f32 0.0, %v1441
      %v1443 = vpop.f32.mrb[0].mxu0
      %1444 = vdwg.mxu0
      %v1445 = vld [vmem:[%s10] sm:$0x1]
      %v1447 = vlaneseq
      %v1448 = vshrl.u32 %v1447, 7
      %v1449 = vsub.s32 0, %v1448
      %v1450 = vrot.slane %v1445, %v1449
      %v1452 = vmul.f32 %v1439, %v1450
      %v1453 = vmul.f32 %v1442, %v1450
      %v1454 = vld [vmem:[%s11] sm:$0x1]
      %v1456 = vlaneseq
      %v1457 = vshrl.u32 %v1456, 7
      %v1458 = vsub.s32 0, %v1457
      %v1459 = vrot.slane %v1454, %v1458
      %v1461 = vadd.f32 %v1452, %v1459
      %v1462 = vadd.f32 %v1453, %v1459
      %v1463 = vunpack.c.l.bf16 %v676
      %v1464 = vunpack.c.l.bf16 %v677
      %v1465 = vunpack.c.l.bf16 %v678
      %vm1469 = vcmask 1046528
      %v1470 = vrot.slane %v1463, 1
      %v1471 = vrot.slane %v1464, 1
      %v1472 = vsel %vm1469, %v1470, %v1471
      %v1473 = vrot.slane %v1465, 1
      %v1474 = vsel %vm1469, %v1471, %v1473
      %v1477 = vadd.f32 %v1461, %v1472
      %v1478 = vadd.f32 %v1462, %v1474
      %v1479 = vmax.f32 %v1477, 0.0
      %v1480 = vmax.f32 %v1478, 0.0
      %v1481 = vpack.c.bf16 %v1480, %v1479
      %v1483 = vunpack.c.l.b16 %v1481
      %v1484 = vunpack.c.h.b16 %v1481
      %v1485 = vpack.c.b16 %v1483, %v1483
      %v1486 = vpack.c.b16 %v1484, %v1484
      %vm1489 = vcmask 257024
      %1490 = vst.msk [vmem:[%s531] sm:$0xf] %vm1489, %v1485
      %1491 = vst.msk [vmem:[%s531 + $0x4] sm:$0xf] %vm1489, %v1486
      %p1492 = scmp.lt.s32.totalorder %s27, 1
      %s1493 = scalar_select %p1492, %s27, 1
      %p1494 = scmp.lt.s32.totalorder %s28, 15
      %s1495 = scalar_select %p1494, %s28, 15
      %s1496 = smul.addr %s1495, 2
      %s1497 = smul.addr %s1493, 32
      %s1498 = sadd.s32 %s1496, %s1497
      %s1499 = smul.addr %s1498, 4
      %s1500 = scalar_lea.vmem %s12, %s1499
      // Predicated region
      $region69: #{bottleneck_forward.1} parent=67 // pred_check
        %p1501 = pneg %p332
      $region70: #{bottleneck_forward.1} parent=67 // pred_check_branch
        %1503 = sbr.rel (%p1501) target = $region72
      $region71: #{bottleneck_forward.1} parent=67 // pred_region
        _
      $region72: #{bottleneck_forward.1} parent=67 // pred_fallthru
        _
    $region68: #{bottleneck_forward.1} parent=5 // pred_fallthru
      _
    %p1504 = scmp.le.s32.totalorder 2, %s18
    // Predicated region
    $region73: #{bottleneck_forward.1} parent=5 // pred_check
      %p1505 = pneg %p1504
    $region74: #{bottleneck_forward.1} parent=5 // pred_check_branch
      %1507 = sbr.rel (%p1505) target = $region76
    $region75: #{bottleneck_forward.1} parent=5 // pred_region
      %s1508 = ssub.s32 %s18, 2
      // Predicated region
      $region77: #{bottleneck_forward.1} parent=75 // pred_check
        %p1509 = pneg %p338
      $region78: #{bottleneck_forward.1} parent=75 // pred_check_branch
        %1511 = sbr.rel (%p1509) target = $region80
      $region79: #{bottleneck_forward.1} parent=75 // pred_region
        %p1512 = scmp.lt.s32.totalorder %s29, 1
        %s1513 = scalar_select %p1512, %s29, 1
        %p1514 = scmp.lt.s32.totalorder %s30, 15
        %s1515 = scalar_select %p1514, %s30, 15
        %s1516 = smul.addr %s1515, 2
        %s1517 = smul.addr %s1513, 32
        %s1518 = sadd.s32 %s1516, %s1517
        %s1519 = smul.addr %s1518, 4
        %s1520 = scalar_lea.vmem %s12, %s1519
      $region80: #{bottleneck_forward.1} parent=75 // pred_fallthru
        _
    $region76: #{bottleneck_forward.1} parent=5 // pred_fallthru
      _
  $region6: #{bottleneck_forward.1} parent=0 // loop_footer
    %s22 = sadd.s32 1, %s18
  $region7: #{bottleneck_forward.1} parent=0 // loop_footer_branch
    %17 = sbr.rel target = $region3
  $region8: #{bottleneck_forward.1} parent=0 // loop_exit
    _

</llo_original>
